<compile_context>
chip_gen: v7x
topology: tpu7x:2x2x1
jax: 0.10.0
libtpu: 0.0.40
codegen_flags: <defaults>
</compile_context>

<pallas_src>
import jax
import jax.numpy as jnp
import numpy as np
from jax import lax
from jax.experimental import pallas as pl
from jax.experimental.pallas import tpu as pltpu


def _round_up(x, m):
    return (x + m - 1) // m * m


# ---------------------------------------------------------------------------
# Per-generation knobs
# ---------------------------------------------------------------------------
_VMEM_LIMIT_CACHE = None
_IS_V5E_CACHE = None


def _vmem_limit_bytes():
    """Per-generation VMEM budget (advisory): ~3/4 of physical, capped at 100 MiB."""
    global _VMEM_LIMIT_CACHE
    if _VMEM_LIMIT_CACHE is not None:
        return _VMEM_LIMIT_CACHE
    cap = None
    try:
        info = pltpu.get_tpu_info()
        for attr in ("vmem_capacity_bytes", "vmem_size_bytes", "vmem_bytes"):
            v = getattr(info, attr, None)
            if isinstance(v, int) and v > 0:
                cap = v
                break
    except Exception:
        cap = None
    if not cap:
        cap = 64 * 1024 * 1024  # conservative (v7x physical VMEM per TC)
    _VMEM_LIMIT_CACHE = int(max(32 * 1024 * 1024,
                                min(cap * 3 // 4, 100 * 1024 * 1024)))
    return _VMEM_LIMIT_CACHE


def _is_v5e():
    global _IS_V5E_CACHE
    if _IS_V5E_CACHE is not None:
        return _IS_V5E_CACHE
    try:
        kind = jax.devices()[0].device_kind.lower()
        _IS_V5E_CACHE = ("v5e" in kind) or ("v5 lite" in kind) or ("v5litepod" in kind)
    except Exception:
        _IS_V5E_CACHE = False
    return _IS_V5E_CACHE


# ---------------------------------------------------------------------------
# Kernel 1: plain GEMM + ReLU  (strided conv1 via explicit im2col, bf16)
# ---------------------------------------------------------------------------
def _gemm_relu_kernel(a_ref, w_ref, o_ref):
    acc = jnp.dot(a_ref[...], w_ref[...], preferred_element_type=jnp.float32)
    o_ref[...] = jnp.maximum(acc, 0.0).astype(o_ref.dtype)


def _matmul_relu(a, w, out_dtype):
    """relu(A @ W).  A: (M, K) bf16, M % 128 == 0;  W: (K, Nc) bf16, Nc % 128 == 0."""
    M, K = a.shape
    Nc = w.shape[1]
    tm = 256 if (M % 256 == 0 and M >= 2048) else 128
    tn = 128 if (_is_v5e() or Nc % 256 != 0) else 256
    cost = pl.CostEstimate(
        flops=int(2 * M * K * Nc),
        transcendentals=0,
        bytes_accessed=int(a.size * 2 + w.size * 2
                           + M * Nc * jnp.dtype(out_dtype).itemsize),
    )
    return pl.pallas_call(
        _gemm_relu_kernel,
        out_shape=jax.ShapeDtypeStruct((M, Nc), out_dtype),
        grid_spec=pltpu.PrefetchScalarGridSpec(
            num_scalar_prefetch=0,
            # cout OUTER so the (K, tn) weight tile is constant across the
            # inner row loop and is not re-DMA'd every step.
            grid=(Nc // tn, M // tm),
            in_specs=[
                pl.BlockSpec((tm, K), lambda j, i: (i, 0)),
                pl.BlockSpec((K, tn), lambda j, i: (0, j)),
            ],
            out_specs=pl.BlockSpec((tm, tn), lambda j, i: (i, j)),
        ),
        compiler_params=pltpu.CompilerParams(
            dimension_semantics=("parallel", "parallel"),
            vmem_limit_bytes=_vmem_limit_bytes(),
        ),
        cost_estimate=cost,
    )(a, w)


# ---------------------------------------------------------------------------
# Kernel 2: fused-im2col 3x3 / stride-1 conv (+ optional fused residual) + ReLU
#           Weight kept VMEM-resident; taps sliced from a bf16 VMEM slab.
# ---------------------------------------------------------------------------
def _make_fused_conv_kernel(tm, tnc, taps, shortcut_mode):
    def kernel(*refs):
        if shortcut_mode == "proj":
            a_cur, a_nxt, w_ref, s_ref, ws_ref, o_ref, slab = refs
        elif shortcut_mode == "add":
            a_cur, a_nxt, w_ref, s_ref, o_ref, slab = refs
        else:
            a_cur, a_nxt, w_ref, o_ref, slab = refs

        # Stage the two consecutive bf16 activation row-blocks contiguously in
        # a VMEM scratch slab once; each 3x3 tap is then a static bf16 row
        # offset into the slab (no f32 round trip, no value concatenation).
        slab[0:tm, :] = a_cur[...]
        slab[tm:2 * tm, :] = a_nxt[...]

        pc = o_ref.shape[1]
        for c0 in range(0, pc, tnc):          # static unroll over column chunks
            acc = jnp.zeros((tm, tnc), jnp.float32)
            for t, off in enumerate(taps):    # static unroll, 9 taps
                acc = acc + jnp.dot(slab[off:off + tm, :],
                                    w_ref[t, :, c0:c0 + tnc],
                                    preferred_element_type=jnp.float32)
            if shortcut_mode == "proj":       # fused 1x1 projection (MXU)
                acc = acc + jnp.dot(s_ref[...], ws_ref[:, c0:c0 + tnc],
                                    preferred_element_type=jnp.float32)
            elif shortcut_mode == "add":      # identity shortcut (VPU add)
                acc = acc + s_ref[:, c0:c0 + tnc].astype(jnp.float32)
            o_ref[:, c0:c0 + tnc] = jnp.maximum(acc, 0.0).astype(o_ref.dtype)

    return kernel


def _conv3x3_s1_fused(x_nhwc, w_hwio, shortcut_mode=None, s_operand=None,
                      ws=None, out_dtype=jnp.bfloat16):
    """relu(conv3x3_s1_p1(x) [+ shortcut]) with im2col fused into the kernel.

    x_nhwc: (N, H, W, C).  w_hwio: (3, 3, C, Pc), Pc % 128 == 0.
    shortcut_mode: None | 'add' (s_operand (N,H,W,Pc)) | 'proj'
    (s_operand (N,H,W,Cs), ws (Cs,Pc)).  Returns (N, H, W, Pc) in out_dtype.
    """
    N, H, W, C = x_nhwc.shape
    Pc = w_hwio.shape[-1]
    Hp, Wp = H + 2, W + 2
    taps = tuple(kh * Wp + kw for kh in range(3) for kw in range(3))
    M = N * Hp * Wp

    # Row tile: performance knob (amortizes ~0.35us/step), only hard constraint
    # is tm > 2*Wp+2 (tap halo fits inside two consecutive row-blocks).
    halo_min = max(128, _round_up(taps[-1] + 1, 128))
    tm = halo_min
    while tm < 512 and M >= 8 * tm:
        tm *= 2

    # Output-column chunk inside the kernel: bounds f32 acc pressure (v5e) while
    # keeping the whole weight resident.
    tnc = 128 if (_is_v5e() or Pc % 256 != 0) else 256

    # Defensive VMEM check (double-buffered inputs + resident weight + scratch).
    vmem_limit = _vmem_limit_bytes()
    cs = s_operand.shape[-1] if shortcut_mode == "proj" else Pc

    def _usage(tm_):
        u = 2 * 2 * tm_ * C * 2                     # a_cur + a_nxt (x2 buffers), bf16
        u += 2 * 9 * C * Pc * 2                     # resident weight (x2 buffers)
        u += 2 * tm_ * C * 2                        # slab scratch
        u += 2 * tm_ * Pc * jnp.dtype(out_dtype).itemsize
        if shortcut_mode == "proj":
            u += 2 * tm_ * cs * 2 + 2 * cs * Pc * 2
        elif shortcut_mode == "add":
            u += 2 * tm_ * Pc * 2
        return u

    while tm > halo_min and _usage(tm) > 0.8 * vmem_limit:
        tm //= 2

    M_pad = _round_up(M, tm)

    # Flattened zero-padded activation; one extra zero row-block so the
    # "next block" operand exists for the last grid step.
    xp = jnp.pad(x_nhwc.astype(jnp.bfloat16), ((0, 0), (1, 1), (1, 1), (0, 0)))
    a_flat = jnp.pad(xp.reshape(M, C), ((0, M_pad + tm - M), (0, 0)))
    w_taps = w_hwio.astype(jnp.bfloat16).reshape(9, C, Pc)

    inputs = [a_flat, a_flat, w_taps]
    in_specs = [
        pl.BlockSpec((tm, C), lambda i: (i, 0)),
        pl.BlockSpec((tm, C), lambda i: (i + 1, 0)),
        # whole weight, constant block index -> DMA'd once, VMEM-resident
        pl.BlockSpec((9, C, Pc), lambda i: (0, 0, 0)),
    ]
    flops = 2 * M_pad * 9 * C * Pc
    bytes_accessed = (2 * M_pad * C * 2 + w_taps.size * 2
                      + M_pad * Pc * jnp.dtype(out_dtype).itemsize)

    if shortcut_mode is not None:
        # Embed the shortcut on the same padded-grid row indexing as the output.
        sp = jnp.pad(s_operand.astype(jnp.bfloat16),
                     ((0, 0), (0, 2), (0, 2), (0, 0)))
        Cs = sp.shape[-1]
        s_flat = jnp.pad(sp.reshape(M, Cs), ((0, M_pad - M), (0, 0)))
        if shortcut_mode == "proj":
            ws_b = ws.astype(jnp.bfloat16)                       # (Cs, Pc)
            inputs += [s_flat, ws_b]
            in_specs += [pl.BlockSpec((tm, Cs), lambda i: (i, 0)),
                         pl.BlockSpec((Cs, Pc), lambda i: (0, 0))]
            flops += 2 * M_pad * Cs * Pc
            bytes_accessed += M_pad * Cs * 2 + ws_b.size * 2
        else:  # 'add'
            inputs += [s_flat]
            in_specs += [pl.BlockSpec((tm, Pc), lambda i: (i, 0))]
            bytes_accessed += M_pad * Pc * 2

    kernel = _make_fused_conv_kernel(tm, tnc, taps, shortcut_mode)
    out = pl.pallas_call(
        kernel,
        out_shape=jax.ShapeDtypeStruct((M_pad, Pc), out_dtype),
        grid_spec=pltpu.PrefetchScalarGridSpec(
            num_scalar_prefetch=0,
            grid=(M_pad // tm,),                     # rows-only grid (megacore split)
            in_specs=in_specs,
            out_specs=pl.BlockSpec((tm, Pc), lambda i: (i, 0)),
            scratch_shapes=[pltpu.VMEM((2 * tm, C), jnp.bfloat16)],
        ),
        compiler_params=pltpu.CompilerParams(
            dimension_semantics=("parallel",),
            vmem_limit_bytes=vmem_limit,
        ),
        cost_estimate=pl.CostEstimate(flops=int(flops), transcendentals=0,
                                      bytes_accessed=int(bytes_accessed)),
    )(*inputs)

    # Valid outputs sit at padded-grid coordinates [:, :H, :W].
    return out[:M].reshape(N, Hp, Wp, Pc)[:, :H, :W, :]


# ---------------------------------------------------------------------------
# Glue: explicit im2col (only for the strided conv1)
# ---------------------------------------------------------------------------
def _im2col(x_nhwc, ksize, stride, pad):
    """Extract conv patches (kh-major, kw, then cin) as a 2-D matrix (XLA glue)."""
    N, H, W, C = x_nhwc.shape
    xp = jnp.pad(x_nhwc, ((0, 0), (pad, pad), (pad, pad), (0, 0)))
    Ho = (H + 2 * pad - ksize) // stride + 1
    Wo = (W + 2 * pad - ksize) // stride + 1
    cols = []
    for kh in range(ksize):
        for kw in range(ksize):
            patch = lax.slice(
                xp,
                (0, kh, kw, 0),
                (N, kh + (Ho - 1) * stride + 1, kw + (Wo - 1) * stride + 1, C),
                (1, stride, stride, 1),
            )
            cols.append(patch)
    cols = jnp.concatenate(cols, axis=-1)
    return cols.reshape(N * Ho * Wo, ksize * ksize * C), (N, Ho, Wo)


# ---------------------------------------------------------------------------
# BasicBlock (use_batchnorm=False path)
# ---------------------------------------------------------------------------
class BasicBlockPallas:
    expansion = 1

    def __init__(self, in_planes, planes, stride=1, key=None):
        self.in_planes = in_planes
        self.planes = planes
        self.stride = stride
        if key is None:
            key = jax.random.PRNGKey(0)
        k1, k2, k3 = jax.random.split(key, 3)
        # Weights stored HWIO (kh, kw, cin, cout), matching the tap ordering.
        self.w1 = jax.random.normal(k1, (3, 3, in_planes, planes), jnp.float32) * 0.1
        self.w2 = jax.random.normal(k2, (3, 3, planes, planes), jnp.float32) * 0.1
        self.has_proj = (stride != 1) or (in_planes != self.expansion * planes)
        self.w_sc = (
            jax.random.normal(k3, (in_planes, self.expansion * planes), jnp.float32) * 0.1
            if self.has_proj else None
        )

    def __call__(self, x_nchw):
        # Cast to bf16 BEFORE the layout transpose/padding (halves wrapper traffic).
        x = jnp.transpose(x_nchw.astype(jnp.bfloat16), (0, 2, 3, 1))  # NCHW -> NHWC
        N, H, W, Cin = x.shape
        P = self.planes
        Pc = _round_up(P, 128)                 # lane-dense cout
        s = self.stride
        Ho = (H - 1) // s + 1
        Wo = (W - 1) // s + 1

        # Zero-pad weights to lane-dense cout (and cin of conv2 to match out1).
        w1p = jnp.pad(self.w1, ((0, 0), (0, 0), (0, 0), (0, Pc - P)))        # (3,3,Cin,Pc)
        w2p = jnp.pad(self.w2, ((0, 0), (0, 0), (0, Pc - P), (0, Pc - P)))   # (3,3,Pc,Pc)

        # --- conv1 + ReLU ---------------------------------------------------
        if s == 1:
            out1 = _conv3x3_s1_fused(x, w1p, shortcut_mode=None,
                                     out_dtype=jnp.bfloat16)                 # (N,H,W,Pc)
        else:
            a1, _ = _im2col(x, 3, s, 1)                                      # (M1, 9*Cin) bf16
            M1 = a1.shape[0]
            M1p = _round_up(M1, 128)
            a1 = jnp.pad(a1, ((0, M1p - M1), (0, 0)))
            w1m = w1p.reshape(9 * Cin, Pc).astype(jnp.bfloat16)
            out1 = _matmul_relu(a1, w1m, jnp.bfloat16)[:M1]
            out1 = out1.reshape(N, Ho, Wo, Pc)

        # --- shortcut operand -------------------------------------------------
        if self.has_proj:
            sc = x if s == 1 else x[:, ::s, ::s, :]                          # (N,Ho,Wo,Cin) bf16
            ws = jnp.pad(self.w_sc, ((0, 0), (0, Pc - P))).astype(jnp.bfloat16)
            mode = "proj"
        else:
            sc = jnp.pad(x, ((0, 0), (0, 0), (0, 0), (0, Pc - P)))           # bf16
            ws = None
            mode = "add"

        # --- conv2 + shortcut + add + ReLU (single fused kernel, bf16 out) ----
        out = _conv3x3_s1_fused(out1, w2p, shortcut_mode=mode,
                                s_operand=sc, ws=ws, out_dtype=jnp.bfloat16)  # (N,Ho,Wo,Pc)
        out = jnp.transpose(out[..., :P], (0, 3, 1, 2))                      # NHWC -> NCHW (bf16)
        return out.astype(jnp.float32)


# ---------------------------------------------------------------------------
# Pure-XLA reference with matching bf16 quantization points
# ---------------------------------------------------------------------------
def _reference_forward(block, x_nchw):
    xb = jnp.transpose(x_nchw, (0, 2, 3, 1)).astype(jnp.bfloat16)
    dn = ("NHWC", "HWIO", "NHWC")
    s = block.stride
    w1b = block.w1.astype(jnp.bfloat16)
    w2b = block.w2.astype(jnp.bfloat16)
    out = lax.conv_general_dilated(xb, w1b, (s, s), ((1, 1), (1, 1)),
                                   dimension_numbers=dn,
                                   preferred_element_type=jnp.float32)
    out = jnp.maximum(out, 0.0).astype(jnp.bfloat16)
    out = lax.conv_general_dilated(out, w2b, (1, 1), ((1, 1), (1, 1)),
                                   dimension_numbers=dn,
                                   preferred_element_type=jnp.float32)
    if block.has_proj:
        wsb = block.w_sc.astype(jnp.bfloat16).reshape(1, 1, block.in_planes, block.planes)
        sc = lax.conv_general_dilated(xb, wsb, (s, s), ((0, 0), (0, 0)),
                                      dimension_numbers=dn,
                                      preferred_element_type=jnp.float32)
    else:
        sc = xb.astype(jnp.float32)
    out = jnp.maximum(out + sc, 0.0)
    return jnp.transpose(out, (0, 3, 1, 2))


if __name__ == "__main__":
    key = jax.random.PRNGKey(0)
    kx1, kp1, kx2, kp2, kx3, kp3 = jax.random.split(key, 6)

    # Case 1: stride-2 downsampling block with projection shortcut.
    N, Cin, H, W = 2, 4, 16, 16
    planes, stride = 8, 2
    x1 = jax.random.normal(kx1, (N, Cin, H, W), jnp.float32)
    blk1 = BasicBlockPallas(Cin, planes, stride=stride, key=kp1)
    y1 = jax.block_until_ready(jax.jit(blk1.__call__)(x1))        # (2, 8, 8, 8) NCHW
    y1_ref = jax.block_until_ready(_reference_forward(blk1, x1))
    np.testing.assert_allclose(np.asarray(y1, np.float32), np.asarray(y1_ref, np.float32),
                               rtol=1e-2, atol=1e-2)

    # Case 2: stride-1 block with identity shortcut (fused conv1 + VPU-add residual).
    x2 = jax.random.normal(kx2, (2, 8, 16, 16), jnp.float32)
    blk2 = BasicBlockPallas(8, 8, stride=1, key=kp2)
    y2 = jax.block_until_ready(jax.jit(blk2.__call__)(x2))        # (2, 8, 16, 16) NCHW
    y2_ref = jax.block_until_ready(_reference_forward(blk2, x2))
    np.testing.assert_allclose(np.asarray(y2, np.float32), np.asarray(y2_ref, np.float32),
                               rtol=1e-2, atol=1e-2)

    # Case 3: planes > 128 (Pc = 256) exercises multi-column-chunk + channel padding.
    x3 = jax.random.normal(kx3, (1, 4, 8, 8), jnp.float32)
    blk3 = BasicBlockPallas(4, 160, stride=2, key=kp3)
    y3 = jax.block_until_ready(jax.jit(blk3.__call__)(x3))        # (1, 160, 4, 4) NCHW
    y3_ref = jax.block_until_ready(_reference_forward(blk3, x3))
    np.testing.assert_allclose(np.asarray(y3, np.float32), np.asarray(y3_ref, np.float32),
                               rtol=1e-2, atol=1e-2)

    print("KERNEL_OK")
</pallas_src>

<mosaic_0001>
module attributes {stable_mosaic.version = 11 : i64} {
  func.func @_gemm_relu_kernel(%arg0: i32, %arg1: i32, %arg2: memref<128x36xbf16, #tpu.memory_space<vmem>>, %arg3: memref<36x128xbf16, #tpu.memory_space<vmem>>, %arg4: memref<128x128xbf16, #tpu.memory_space<vmem>>) attributes {dimension_semantics = [#tpu.dimension_semantics<parallel>, #tpu.dimension_semantics<parallel>], iteration_bounds = array<i64: 1, 1>, scalar_prefetch = 0 : i64, scratch_operands = 0 : i64, tpu.core_type = #tpu.core_type<tc>, window_params = [{transform_indices = @transform_0, window_bounds = array<i64: 128, 36>}, {transform_indices = @transform_1, window_bounds = array<i64: 36, 128>}, {transform_indices = @transform_2, window_bounds = array<i64: 128, 128>}]} {
    %c0 = arith.constant 0 : index
    %c0_0 = arith.constant 0 : index
    %0 = vector.load %arg2[%c0, %c0_0] : memref<128x36xbf16, #tpu.memory_space<vmem>>, vector<128x36xbf16>
    %c0_1 = arith.constant 0 : index
    %c0_2 = arith.constant 0 : index
    %1 = vector.load %arg3[%c0_1, %c0_2] : memref<36x128xbf16, #tpu.memory_space<vmem>>, vector<36x128xbf16>
    %cst = arith.constant dense<0.000000e+00> : vector<128x128xf32>
    %2 = tpu.matmul %0, %1, %cst {dimension_numbers = #tpu.dot_dimension_numbers<[1], [0], [0], [1], [0, 0, 1, 1], [], []>} : vector<128x36xbf16>, vector<36x128xbf16>, vector<128x128xf32> -> vector<128x128xf32>
    %cst_3 = arith.constant 0.000000e+00 : f32
    %3 = vector.broadcast %cst_3 : f32 to vector<128x128xf32>
    %4 = arith.maximumf %2, %3 : vector<128x128xf32>
    %5 = arith.truncf %4 : vector<128x128xf32> to vector<128x128xbf16>
    %c0_4 = arith.constant 0 : index
    %c0_5 = arith.constant 0 : index
    %6 = vector.load %arg4[%c0_4, %c0_5] : memref<128x128xbf16, #tpu.memory_space<vmem>>, vector<128x128xbf16>
    tpu.vector_store %arg4[%c0_4, %c0_5], %5 {strides = array<i32>} : memref<128x128xbf16, #tpu.memory_space<vmem>>, vector<128x128xbf16>,
    return
  }
  func.func @transform_0(%arg0: i32, %arg1: i32) -> (i32, i32) {
    %c0_i32 = arith.constant 0 : i32
    %c0_i32_0 = arith.constant 0 : i32
    return %arg1, %c0_i32 : i32, i32
  }
  func.func @transform_1(%arg0: i32, %arg1: i32) -> (i32, i32) {
    %c0_i32 = arith.constant 0 : i32
    %c0_i32_0 = arith.constant 0 : i32
    return %c0_i32, %arg0 : i32, i32
  }
  func.func @transform_2(%arg0: i32, %arg1: i32) -> (i32, i32) {
    %c0_i32 = arith.constant 0 : i32
    return %arg1, %arg0 : i32, i32
  }
}

module attributes {stable_mosaic.version = 11 : i64} {
  func.func @kernel(%arg0: i32, %arg1: memref<128x128xbf16, #tpu.memory_space<vmem>>, %arg2: memref<128x128xbf16, #tpu.memory_space<vmem>>, %arg3: memref<9x128x128xbf16, #tpu.memory_space<vmem>>, %arg4: memref<128x4xbf16, #tpu.memory_space<vmem>>, %arg5: memref<4x128xbf16, #tpu.memory_space<vmem>>, %arg6: memref<128x128xbf16, #tpu.memory_space<vmem>>, %arg7: memref<256x128xbf16, #tpu.memory_space<vmem>>) attributes {dimension_semantics = [#tpu.dimension_semantics<parallel>], iteration_bounds = array<i64: 2>, scalar_prefetch = 0 : i64, scratch_operands = 1 : i64, tpu.core_type = #tpu.core_type<tc>, window_params = [{transform_indices = @transform_0, window_bounds = array<i64: 128, 128>}, {transform_indices = @transform_1, window_bounds = array<i64: 128, 128>}, {pipeline_mode = #tpu.pipeline_mode<synchronous>, transform_indices = @transform_2, window_bounds = array<i64: 9, 128, 128>}, {transform_indices = @transform_3, window_bounds = array<i64: 128, 4>}, {pipeline_mode = #tpu.pipeline_mode<synchronous>, transform_indices = @transform_4, window_bounds = array<i64: 4, 128>}, {transform_indices = @transform_5, window_bounds = array<i64: 128, 128>}]} {
    %c0 = arith.constant 0 : index
    %c0_0 = arith.constant 0 : index
    %0 = vector.load %arg1[%c0, %c0_0] : memref<128x128xbf16, #tpu.memory_space<vmem>>, vector<128x128xbf16>
    %c0_1 = arith.constant 0 : index
    %c0_2 = arith.constant 0 : index
    %1 = vector.load %arg7[%c0_1, %c0_2] : memref<256x128xbf16, #tpu.memory_space<vmem>>, vector<128x128xbf16>
    tpu.vector_store %arg7[%c0_1, %c0_2], %0 {strides = array<i32>} : memref<256x128xbf16, #tpu.memory_space<vmem>>, vector<128x128xbf16>,
    %c0_3 = arith.constant 0 : index
    %c0_4 = arith.constant 0 : index
    %2 = vector.load %arg2[%c0_3, %c0_4] : memref<128x128xbf16, #tpu.memory_space<vmem>>, vector<128x128xbf16>
    %c128 = arith.constant 128 : index
    %c0_5 = arith.constant 0 : index
    %3 = vector.load %arg7[%c128, %c0_5] : memref<256x128xbf16, #tpu.memory_space<vmem>>, vector<128x128xbf16>
    tpu.vector_store %arg7[%c128, %c0_5], %2 {strides = array<i32>} : memref<256x128xbf16, #tpu.memory_space<vmem>>, vector<128x128xbf16>,
    %cst = arith.constant 0.000000e+00 : f32
    %4 = vector.broadcast %cst : f32 to vector<128x128xf32>
    %c0_6 = arith.constant 0 : index
    %c0_7 = arith.constant 0 : index
    %5 = vector.load %arg7[%c0_6, %c0_7] : memref<256x128xbf16, #tpu.memory_space<vmem>>, vector<128x128xbf16>
    %c0_8 = arith.constant 0 : index
    %c0_9 = arith.constant 0 : index
    %c0_10 = arith.constant 0 : index
    %6 = vector.load %arg3[%c0_8, %c0_9, %c0_10] : memref<9x128x128xbf16, #tpu.memory_space<vmem>>, vector<1x128x128xbf16>
    %7 = vector.shape_cast %6 : vector<1x128x128xbf16> to vector<128x128xbf16>
    %cst_11 = arith.constant dense<0.000000e+00> : vector<128x128xf32>
    %8 = tpu.matmul %5, %7, %cst_11 {dimension_numbers = #tpu.dot_dimension_numbers<[1], [0], [0], [1], [0, 0, 1, 1], [], []>} : vector<128x128xbf16>, vector<128x128xbf16>, vector<128x128xf32> -> vector<128x128xf32>
    %9 = arith.addf %4, %8 : vector<128x128xf32>
    %c1 = arith.constant 1 : index
    %c0_12 = arith.constant 0 : index
    %10 = vector.load %arg7[%c1, %c0_12] : memref<256x128xbf16, #tpu.memory_space<vmem>>, vector<128x128xbf16>
    %c1_13 = arith.constant 1 : index
    %c0_14 = arith.constant 0 : index
    %c0_15 = arith.constant 0 : index
    %11 = vector.load %arg3[%c1_13, %c0_14, %c0_15] : memref<9x128x128xbf16, #tpu.memory_space<vmem>>, vector<1x128x128xbf16>
    %12 = vector.shape_cast %11 : vector<1x128x128xbf16> to vector<128x128xbf16>
    %cst_16 = arith.constant dense<0.000000e+00> : vector<128x128xf32>
    %13 = tpu.matmul %10, %12, %cst_16 {dimension_numbers = #tpu.dot_dimension_numbers<[1], [0], [0], [1], [0, 0, 1, 1], [], []>} : vector<128x128xbf16>, vector<128x128xbf16>, vector<128x128xf32> -> vector<128x128xf32>
    %14 = arith.addf %9, %13 : vector<128x128xf32>
    %c2 = arith.constant 2 : index
    %c0_17 = arith.constant 0 : index
    %15 = vector.load %arg7[%c2, %c0_17] : memref<256x128xbf16, #tpu.memory_space<vmem>>, vector<128x128xbf16>
    %c2_18 = arith.constant 2 : index
    %c0_19 = arith.constant 0 : index
    %c0_20 = arith.constant 0 : index
    %16 = vector.load %arg3[%c2_18, %c0_19, %c0_20] : memref<9x128x128xbf16, #tpu.memory_space<vmem>>, vector<1x128x128xbf16>
    %17 = vector.shape_cast %16 : vector<1x128x128xbf16> to vector<128x128xbf16>
    %cst_21 = arith.constant dense<0.000000e+00> : vector<128x128xf32>
    %18 = tpu.matmul %15, %17, %cst_21 {dimension_numbers = #tpu.dot_dimension_numbers<[1], [0], [0], [1], [0, 0, 1, 1], [], []>} : vector<128x128xbf16>, vector<128x128xbf16>, vector<128x128xf32> -> vector<128x128xf32>
    %19 = arith.addf %14, %18 : vector<128x128xf32>
    %c10 = arith.constant 10 : index
    %c0_22 = arith.constant 0 : index
    %20 = vector.load %arg7[%c10, %c0_22] : memref<256x128xbf16, #tpu.memory_space<vmem>>, vector<128x128xbf16>
    %c3 = arith.constant 3 : index
    %c0_23 = arith.constant 0 : index
    %c0_24 = arith.constant 0 : index
    %21 = vector.load %arg3[%c3, %c0_23, %c0_24] : memref<9x128x128xbf16, #tpu.memory_space<vmem>>, vector<1x128x128xbf16>
    %22 = vector.shape_cast %21 : vector<1x128x128xbf16> to vector<128x128xbf16>
    %cst_25 = arith.constant dense<0.000000e+00> : vector<128x128xf32>
    %23 = tpu.matmul %20, %22, %cst_25 {dimension_numbers = #tpu.dot_dimension_numbers<[1], [0], [0], [1], [0, 0, 1, 1], [], []>} : vector<128x128xbf16>, vector<128x128xbf16>, vector<128x128xf32> -> vector<128x128xf32>
    %24 = arith.addf %19, %23 : vector<128x128xf32>
    %c11 = arith.constant 11 : index
    %c0_26 = arith.constant 0 : index
    %25 = vector.load %arg7[%c11, %c0_26] : memref<256x128xbf16, #tpu.memory_space<vmem>>, vector<128x128xbf16>
    %c4 = arith.constant 4 : index
    %c0_27 = arith.constant 0 : index
    %c0_28 = arith.constant 0 : index
    %26 = vector.load %arg3[%c4, %c0_27, %c0_28] : memref<9x128x128xbf16, #tpu.memory_space<vmem>>, vector<1x128x128xbf16>
    %27 = vector.shape_cast %26 : vector<1x128x128xbf16> to vector<128x128xbf16>
    %cst_29 = arith.constant dense<0.000000e+00> : vector<128x128xf32>
    %28 = tpu.matmul %25, %27, %cst_29 {dimension_numbers = #tpu.dot_dimension_numbers<[1], [0], [0], [1], [0, 0, 1, 1], [], []>} : vector<128x128xbf16>, vector<128x128xbf16>, vector<128x128xf32> -> vector<128x128xf32>
    %29 = arith.addf %24, %28 : vector<128x128xf32>
    %c12 = arith.constant 12 : index
    %c0_30 = arith.constant 0 : index
    %30 = vector.load %arg7[%c12, %c0_30] : memref<256x128xbf16, #tpu.memory_space<vmem>>, vector<128x128xbf16>
    %c5 = arith.constant 5 : index
    %c0_31 = arith.constant 0 : index
    %c0_32 = arith.constant 0 : index
    %31 = vector.load %arg3[%c5, %c0_31, %c0_32] : memref<9x128x128xbf16, #tpu.memory_space<vmem>>, vector<1x128x128xbf16>
    %32 = vector.shape_cast %31 : vector<1x128x128xbf16> to vector<128x128xbf16>
    %cst_33 = arith.constant dense<0.000000e+00> : vector<128x128xf32>
    %33 = tpu.matmul %30, %32, %cst_33 {dimension_numbers = #tpu.dot_dimension_numbers<[1], [0], [0], [1], [0, 0, 1, 1], [], []>} : vector<128x128xbf16>, vector<128x128xbf16>, vector<128x128xf32> -> vector<128x128xf32>
    %34 = arith.addf %29, %33 : vector<128x128xf32>
    %c20 = arith.constant 20 : index
    %c0_34 = arith.constant 0 : index
    %35 = vector.load %arg7[%c20, %c0_34] : memref<256x128xbf16, #tpu.memory_space<vmem>>, vector<128x128xbf16>
    %c6 = arith.constant 6 : index
    %c0_35 = arith.constant 0 : index
    %c0_36 = arith.constant 0 : index
    %36 = vector.load %arg3[%c6, %c0_35, %c0_36] : memref<9x128x128xbf16, #tpu.memory_space<vmem>>, vector<1x128x128xbf16>
    %37 = vector.shape_cast %36 : vector<1x128x128xbf16> to vector<128x128xbf16>
    %cst_37 = arith.constant dense<0.000000e+00> : vector<128x128xf32>
    %38 = tpu.matmul %35, %37, %cst_37 {dimension_numbers = #tpu.dot_dimension_numbers<[1], [0], [0], [1], [0, 0, 1, 1], [], []>} : vector<128x128xbf16>, vector<128x128xbf16>, vector<128x128xf32> -> vector<128x128xf32>
    %39 = arith.addf %34, %38 : vector<128x128xf32>
    %c21 = arith.constant 21 : index
    %c0_38 = arith.constant 0 : index
    %40 = vector.load %arg7[%c21, %c0_38] : memref<256x128xbf16, #tpu.memory_space<vmem>>, vector<128x128xbf16>
    %c7 = arith.constant 7 : index
    %c0_39 = arith.constant 0 : index
    %c0_40 = arith.constant 0 : index
    %41 = vector.load %arg3[%c7, %c0_39, %c0_40] : memref<9x128x128xbf16, #tpu.memory_space<vmem>>, vector<1x128x128xbf16>
    %42 = vector.shape_cast %41 : vector<1x128x128xbf16> to vector<128x128xbf16>
    %cst_41 = arith.constant dense<0.000000e+00> : vector<128x128xf32>
    %43 = tpu.matmul %40, %42, %cst_41 {dimension_numbers = #tpu.dot_dimension_numbers<[1], [0], [0], [1], [0, 0, 1, 1], [], []>} : vector<128x128xbf16>, vector<128x128xbf16>, vector<128x128xf32> -> vector<128x128xf32>
    %44 = arith.addf %39, %43 : vector<128x128xf32>
    %c22 = arith.constant 22 : index
    %c0_42 = arith.constant 0 : index
    %45 = vector.load %arg7[%c22, %c0_42] : memref<256x128xbf16, #tpu.memory_space<vmem>>, vector<128x128xbf16>
    %c8 = arith.constant 8 : index
    %c0_43 = arith.constant 0 : index
    %c0_44 = arith.constant 0 : index
    %46 = vector.load %arg3[%c8, %c0_43, %c0_44] : memref<9x128x128xbf16, #tpu.memory_space<vmem>>, vector<1x128x128xbf16>
    %47 = vector.shape_cast %46 : vector<1x128x128xbf16> to vector<128x128xbf16>
    %cst_45 = arith.constant dense<0.000000e+00> : vector<128x128xf32>
    %48 = tpu.matmul %45, %47, %cst_45 {dimension_numbers = #tpu.dot_dimension_numbers<[1], [0], [0], [1], [0, 0, 1, 1], [], []>} : vector<128x128xbf16>, vector<128x128xbf16>, vector<128x128xf32> -> vector<128x128xf32>
    %49 = arith.addf %44, %48 : vector<128x128xf32>
    %c0_46 = arith.constant 0 : index
    %c0_47 = arith.constant 0 : index
    %50 = vector.load %arg4[%c0_46, %c0_47] : memref<128x4xbf16, #tpu.memory_space<vmem>>, vector<128x4xbf16>
    %c0_48 = arith.constant 0 : index
    %c0_49 = arith.constant 0 : index
    %51 = vector.load %arg5[%c0_48, %c0_49] : memref<4x128xbf16, #tpu.memory_space<vmem>>, vector<4x128xbf16>
    %cst_50 = arith.constant dense<0.000000e+00> : vector<128x128xf32>
    %52 = tpu.matmul %50, %51, %cst_50 {dimension_numbers = #tpu.dot_dimension_numbers<[1], [0], [0], [1], [0, 0, 1, 1], [], []>} : vector<128x4xbf16>, vector<4x128xbf16>, vector<128x128xf32> -> vector<128x128xf32>
    %53 = arith.addf %49, %52 : vector<128x128xf32>
    %cst_51 = arith.constant 0.000000e+00 : f32
    %54 = vector.broadcast %cst_51 : f32 to vector<128x128xf32>
    %55 = arith.maximumf %53, %54 : vector<128x128xf32>
    %56 = arith.truncf %55 : vector<128x128xf32> to vector<128x128xbf16>
    %c0_52 = arith.constant 0 : index
    %c0_53 = arith.constant 0 : index
    %57 = vector.load %arg6[%c0_52, %c0_53] : memref<128x128xbf16, #tpu.memory_space<vmem>>, vector<128x128xbf16>
    tpu.vector_store %arg6[%c0_52, %c0_53], %56 {strides = array<i32>} : memref<128x128xbf16, #tpu.memory_space<vmem>>, vector<128x128xbf16>,
    return
  }
  func.func @transform_0(%arg0: i32) -> (i32, i32) {
    %c0_i32 = arith.constant 0 : i32
    %c0_i32_0 = arith.constant 0 : i32
    return %arg0, %c0_i32 : i32, i32
  }
  func.func @transform_1(%arg0: i32) -> (i32, i32) {
    %c1_i32 = arith.constant 1 : i32
    %0 = arith.addi %arg0, %c1_i32 : i32
    %c0_i32 = arith.constant 0 : i32
    %c0_i32_0 = arith.constant 0 : i32
    return %0, %c0_i32 : i32, i32
  }
  func.func @transform_2(%arg0: i32) -> (i32, i32, i32) {
    %c0_i32 = arith.constant 0 : i32
    %c0_i32_0 = arith.constant 0 : i32
    %c0_i32_1 = arith.constant 0 : i32
    %c0_i32_2 = arith.constant 0 : i32
    return %c0_i32, %c0_i32_0, %c0_i32_1 : i32, i32, i32
  }
  func.func @transform_3(%arg0: i32) -> (i32, i32) {
    %c0_i32 = arith.constant 0 : i32
    %c0_i32_0 = arith.constant 0 : i32
    return %arg0, %c0_i32 : i32, i32
  }
  func.func @transform_4(%arg0: i32) -> (i32, i32) {
    %c0_i32 = arith.constant 0 : i32
    %c0_i32_0 = arith.constant 0 : i32
    %c0_i32_1 = arith.constant 0 : i32
    return %c0_i32, %c0_i32_0 : i32, i32
  }
  func.func @transform_5(%arg0: i32) -> (i32, i32) {
    %c0_i32 = arith.constant 0 : i32
    %c0_i32_0 = arith.constant 0 : i32
    return %arg0, %c0_i32 : i32, i32
  }
}

</mosaic_0001>

<llo_original>
// kernel: a_call__.2
$region0: #{a_call__.2}
  #allocation0 [shape = 'u32[]', space=smem, size = 0x4, offset = 0x4, fixed_abs, tag = 'smem constant byte address 0x4 - core index']
  #allocation1 [shape = 'u32[144,128]{1,0:T(1,128)}', space=vmem, size = 0x12000, scoped, tag = 'internal scratch']
  %s0 = inlined_call_operand.vmem [shape: bf16[128,36], index: 0, kind: input, shape index: {}]
  %s1 = inlined_call_operand.vmem [shape: bf16[36,128], index: 1, kind: input, shape index: {}]
  %s2 = inlined_call_operand.vmem [shape: bf16[128,128], index: 2, kind: output, shape index: {}]
  %s3 = sld [smem:[#allocation0]]
  $region18: #{a_call__.2} parent=0
    _
  %s5 = ssub.s32 1, %s3
  %s6 = scalar_select 0, %s5, %s3
  // Predicated region
  $region2: #{a_call__.2} parent=0 // pred_check
    _
  $region3: #{a_call__.2} parent=0 // pred_check_branch
    %8 = sbr.rel (0) target = $region5
  $region4: #{a_call__.2} parent=0 // pred_region
    _
  $region5: #{a_call__.2} parent=0 // pred_fallthru
    _
  // Predicated region
  $region6: #{a_call__.2} parent=0 // pred_check
    _
  $region7: #{a_call__.2} parent=0 // pred_check_branch
    %10 = sbr.rel (0) target = $region9
  $region8: #{a_call__.2} parent=0 // pred_region
    _
  $region9: #{a_call__.2} parent=0 // pred_fallthru
    _
  %v12 = vld [vmem:[%s0] sm:$0xf]
  %v13 = vld [vmem:[%s0 + $0x4] sm:$0xf]
  %v14 = vld [vmem:[%s0 + $0x8] sm:$0xf]
  %v15 = vld [vmem:[%s0 + $0xc] sm:$0xf]
  %v16 = vld [vmem:[%s0 + $0x10] sm:$0xf]
  %v17 = vld [vmem:[%s0 + $0x14] sm:$0xf]
  %v18 = vld [vmem:[%s0 + $0x18] sm:$0xf]
  %v19 = vld [vmem:[%s0 + $0x1c] sm:$0xf]
  %v20 = vld [vmem:[%s0 + $0x20] sm:$0xf]
  %v21 = vld [vmem:[%s0 + $0x24] sm:$0xf]
  %v22 = vld [vmem:[%s0 + $0x28] sm:$0xf]
  %v23 = vld [vmem:[%s0 + $0x2c] sm:$0xf]
  %v24 = vld [vmem:[%s0 + $0x30] sm:$0xf]
  %v25 = vld [vmem:[%s0 + $0x34] sm:$0xf]
  %v26 = vld [vmem:[%s0 + $0x38] sm:$0xf]
  %v27 = vld [vmem:[%s0 + $0x3c] sm:$0xf]
  %v28 = vld [vmem:[%s1] sm:$0xf]
  %v29 = vld [vmem:[%s1 + $0x4] sm:$0xf]
  %v30 = vld [vmem:[%s1 + $0x8] sm:$0xf]
  %v31 = vld [vmem:[%s1 + $0xc] sm:$0xf]
  %v32 = vld [vmem:[%s1 + $0x10] sm:$0x3]
  %v49 = vunpack.c.l.b16 %v12
  %v50 = vunpack.c.l.b16 %v13
  %v51 = vunpack.c.l.b16 %v14
  %v52 = vunpack.c.l.b16 %v15
  %v53 = vunpack.c.l.b16 %v16
  %v54 = vunpack.c.l.b16 %v17
  %v55 = vunpack.c.l.b16 %v18
  %v56 = vunpack.c.l.b16 %v19
  %v57 = vunpack.c.l.b16 %v20
  %v58 = vunpack.c.l.b16 %v21
  %v59 = vunpack.c.l.b16 %v22
  %v60 = vunpack.c.l.b16 %v23
  %v61 = vunpack.c.l.b16 %v24
  %v62 = vunpack.c.l.b16 %v25
  %v63 = vunpack.c.l.b16 %v26
  %v64 = vunpack.c.l.b16 %v27
  %v65 = vpack.c.b16 %v50, %v49
  %v66 = vpack.c.b16 %v52, %v51
  %v67 = vpack.c.b16 %v54, %v53
  %v68 = vpack.c.b16 %v56, %v55
  %v69 = vpack.c.b16 %v58, %v57
  %v70 = vpack.c.b16 %v60, %v59
  %v71 = vpack.c.b16 %v62, %v61
  %v72 = vpack.c.b16 %v64, %v63
  %v78 = vunpack.c.l.b16 %v28
  %v79 = vunpack.c.l.b16 %v29
  %v80 = vunpack.c.l.b16 %v30
  %v81 = vunpack.c.l.b16 %v31
  %v82 = vunpack.c.l.b16 %v32
  %v83 = vpack.c.b16 %v79, %v78
  %v84 = vpack.c.b16 %v81, %v80
  %v85 = vpack.c.b16 %v82, %v82
  %vm88 = vcmask 293888
  %v90 = vsel %vm88, %v65, 0
  %v93 = vsel %vm88, %v66, 0
  %v96 = vsel %vm88, %v67, 0
  %v99 = vsel %vm88, %v68, 0
  %v102 = vsel %vm88, %v69, 0
  %v105 = vsel %vm88, %v70, 0
  %v108 = vsel %vm88, %v71, 0
  %v111 = vsel %vm88, %v72, 0
  %vm113 = vcmask 1041408
  %v115 = vsel %vm113, %v85, 0
  %117 = vmatprep.subr.bf16.mxu0 0
  %118 = vmatpush1.bf16.msra.mxu0 %v83
  %119 = vmatprep.subr.bf16.mxu0 0
  %120 = vmatpush1.bf16.msra.mxu0 %v84
  %121 = vmatprep.subr.bf16.mxu0 0
  %122 = vmatpush1.bf16.msra.mxu0 %v115
  %123 = vmatprep.subr.bf16.mxu0 0
  %124 = vmatpush1.bf16.msra.mxu0 0
  %125 = vmatprep.subr.bf16.mxu0 0
  %126 = vmatpush1.bf16.msra.mxu0 0
  %127 = vmatprep.subr.bf16.mxu0 0
  %128 = vmatpush1.bf16.msra.mxu0 0
  %129 = vmatprep.subr.bf16.mxu0 0
  %130 = vmatpush1.bf16.msra.mxu0 0
  %131 = vmatprep.subr.bf16.mxu0 0
  %132 = vmatpush1.bf16.msra.mxu0 0
  %133 = vmatprep.subr.bf16.mxu0 0
  %134 = vmatpush1.bf16.msra.mxu0 0
  %135 = vmatprep.subr.bf16.mxu0 0
  %136 = vmatpush1.bf16.msra.mxu0 0
  %137 = vmatprep.subr.bf16.mxu0 0
  %138 = vmatpush1.bf16.msra.mxu0 0
  %139 = vmatprep.subr.bf16.mxu0 0
  %140 = vmatpush1.bf16.msra.mxu0 0
  %141 = vmatprep.subr.bf16.mxu0 0
  %142 = vmatpush1.bf16.msra.mxu0 0
  %143 = vmatprep.subr.bf16.mxu0 0
  %144 = vmatpush1.bf16.msra.mxu0 0
  %145 = vmatprep.subr.bf16.mxu0 0
  %146 = vmatpush1.bf16.msra.mxu0 0
  %147 = vmatprep.subr.bf16.mxu0 0
  %148 = vmatpush1.bf16.msra.mxu0 0
  %149 = vmatprep.mubr.bf16.mxu0 0
  %150 = vmatmul.mubr.bf16.gmra.mrb[0].mxu0 %v90
  %v151 = vpop.f32.mrb[0].mxu0
  %v152 = vadd.f32 0.0, %v151
  %v153 = vpop.f32.mrb[0].mxu0
  %v154 = vpop.f32.mrb[0].mxu0
  %v155 = vadd.f32 0.0, %v154
  %v156 = vpop.f32.mrb[0].mxu0
  %157 = vmatprep.mubr.bf16.mxu0 0
  %158 = vmatmul.mubr.bf16.gmra.mrb[0].mxu0 %v93
  %v159 = vpop.f32.mrb[0].mxu0
  %v160 = vadd.f32 0.0, %v159
  %v161 = vpop.f32.mrb[0].mxu0
  %v162 = vpop.f32.mrb[0].mxu0
  %v163 = vadd.f32 0.0, %v162
  %v164 = vpop.f32.mrb[0].mxu0
  %165 = vmatprep.mubr.bf16.mxu0 0
  %166 = vmatmul.mubr.bf16.gmra.mrb[0].mxu0 %v96
  %v167 = vpop.f32.mrb[0].mxu0
  %v168 = vadd.f32 0.0, %v167
  %v169 = vpop.f32.mrb[0].mxu0
  %v170 = vpop.f32.mrb[0].mxu0
  %v171 = vadd.f32 0.0, %v170
  %v172 = vpop.f32.mrb[0].mxu0
  %173 = vmatprep.mubr.bf16.mxu0 0
  %174 = vmatmul.mubr.bf16.gmra.mrb[0].mxu0 %v99
  %v175 = vpop.f32.mrb[0].mxu0
  %v176 = vadd.f32 0.0, %v175
  %v177 = vpop.f32.mrb[0].mxu0
  %v178 = vpop.f32.mrb[0].mxu0
  %v179 = vadd.f32 0.0, %v178
  %v180 = vpop.f32.mrb[0].mxu0
  %181 = vmatprep.mubr.bf16.mxu0 0
  %182 = vmatmul.mubr.bf16.gmra.mrb[0].mxu0 %v102
  %v183 = vpop.f32.mrb[0].mxu0
  %v184 = vadd.f32 0.0, %v183
  %v185 = vpop.f32.mrb[0].mxu0
  %v186 = vpop.f32.mrb[0].mxu0
  %v187 = vadd.f32 0.0, %v186
  %v188 = vpop.f32.mrb[0].mxu0
  %189 = vmatprep.mubr.bf16.mxu0 0
  %190 = vmatmul.mubr.bf16.gmra.mrb[0].mxu0 %v105
  %v191 = vpop.f32.mrb[0].mxu0
  %v192 = vadd.f32 0.0, %v191
  %v193 = vpop.f32.mrb[0].mxu0
  %v194 = vpop.f32.mrb[0].mxu0
  %v195 = vadd.f32 0.0, %v194
  %v196 = vpop.f32.mrb[0].mxu0
  %197 = vmatprep.mubr.bf16.mxu0 0
  %198 = vmatmul.mubr.bf16.gmra.mrb[0].mxu0 %v108
  %v199 = vpop.f32.mrb[0].mxu0
  %v200 = vadd.f32 0.0, %v199
  %v201 = vpop.f32.mrb[0].mxu0
  %v202 = vpop.f32.mrb[0].mxu0
  %v203 = vadd.f32 0.0, %v202
  %v204 = vpop.f32.mrb[0].mxu0
  %205 = vmatprep.mubr.bf16.mxu0 0
  %206 = vmatmul.mubr.bf16.gmra.mrb[0].mxu0 %v111
  %v207 = vpop.f32.mrb[0].mxu0
  %v208 = vadd.f32 0.0, %v207
  %v209 = vpop.f32.mrb[0].mxu0
  %v210 = vpop.f32.mrb[0].mxu0
  %v211 = vadd.f32 0.0, %v210
  %v212 = vpop.f32.mrb[0].mxu0
  %213 = vdwg.mxu0
  %v214 = vmax.f32 %v152, 0.0
  %v215 = vmax.f32 %v155, 0.0
  %v216 = vmax.f32 %v160, 0.0
  %v217 = vmax.f32 %v163, 0.0
  %v218 = vmax.f32 %v168, 0.0
  %v219 = vmax.f32 %v171, 0.0
  %v220 = vmax.f32 %v176, 0.0
  %v221 = vmax.f32 %v179, 0.0
  %v222 = vmax.f32 %v184, 0.0
  %v223 = vmax.f32 %v187, 0.0
  %v224 = vmax.f32 %v192, 0.0
  %v225 = vmax.f32 %v195, 0.0
  %v226 = vmax.f32 %v200, 0.0
  %v227 = vmax.f32 %v203, 0.0
  %v228 = vmax.f32 %v208, 0.0
  %v229 = vmax.f32 %v211, 0.0
  %v230 = vpack.c.bf16 %v215, %v214
  %v231 = vpack.c.bf16 %v217, %v216
  %v232 = vpack.c.bf16 %v219, %v218
  %v233 = vpack.c.bf16 %v221, %v220
  %v234 = vpack.c.bf16 %v223, %v222
  %v235 = vpack.c.bf16 %v225, %v224
  %v236 = vpack.c.bf16 %v227, %v226
  %v237 = vpack.c.bf16 %v229, %v228
  %v246 = vunpack.c.l.b16 %v230
  %v247 = vunpack.c.h.b16 %v230
  %v248 = vunpack.c.l.b16 %v231
  %v249 = vunpack.c.h.b16 %v231
  %v250 = vunpack.c.l.b16 %v232
  %v251 = vunpack.c.h.b16 %v232
  %v252 = vunpack.c.l.b16 %v233
  %v253 = vunpack.c.h.b16 %v233
  %v254 = vunpack.c.l.b16 %v234
  %v255 = vunpack.c.h.b16 %v234
  %v256 = vunpack.c.l.b16 %v235
  %v257 = vunpack.c.h.b16 %v235
  %v258 = vunpack.c.l.b16 %v236
  %v259 = vunpack.c.h.b16 %v236
  %v260 = vunpack.c.l.b16 %v237
  %v261 = vunpack.c.h.b16 %v237
  %v262 = vpack.c.b16 %v246, %v246
  %v263 = vpack.c.b16 %v247, %v247
  %v264 = vpack.c.b16 %v248, %v248
  %v265 = vpack.c.b16 %v249, %v249
  %v266 = vpack.c.b16 %v250, %v250
  %v267 = vpack.c.b16 %v251, %v251
  %v268 = vpack.c.b16 %v252, %v252
  %v269 = vpack.c.b16 %v253, %v253
  %v270 = vpack.c.b16 %v254, %v254
  %v271 = vpack.c.b16 %v255, %v255
  %v272 = vpack.c.b16 %v256, %v256
  %v273 = vpack.c.b16 %v257, %v257
  %v274 = vpack.c.b16 %v258, %v258
  %v275 = vpack.c.b16 %v259, %v259
  %v276 = vpack.c.b16 %v260, %v260
  %v277 = vpack.c.b16 %v261, %v261
  %294 = vst [vmem:[%s2] sm:$0xf] %v262
  %295 = vst [vmem:[%s2 + $0x4] sm:$0xf] %v263
  %296 = vst [vmem:[%s2 + $0x8] sm:$0xf] %v264
  %297 = vst [vmem:[%s2 + $0xc] sm:$0xf] %v265
  %298 = vst [vmem:[%s2 + $0x10] sm:$0xf] %v266
  %299 = vst [vmem:[%s2 + $0x14] sm:$0xf] %v267
  %300 = vst [vmem:[%s2 + $0x18] sm:$0xf] %v268
  %301 = vst [vmem:[%s2 + $0x1c] sm:$0xf] %v269
  %302 = vst [vmem:[%s2 + $0x20] sm:$0xf] %v270
  %303 = vst [vmem:[%s2 + $0x24] sm:$0xf] %v271
  %304 = vst [vmem:[%s2 + $0x28] sm:$0xf] %v272
  %305 = vst [vmem:[%s2 + $0x2c] sm:$0xf] %v273
  %306 = vst [vmem:[%s2 + $0x30] sm:$0xf] %v274
  %307 = vst [vmem:[%s2 + $0x34] sm:$0xf] %v275
  %308 = vst [vmem:[%s2 + $0x38] sm:$0xf] %v276
  %309 = vst [vmem:[%s2 + $0x3c] sm:$0xf] %v277
  // Predicated region
  $region10: #{a_call__.2} parent=0 // pred_check
    _
  $region11: #{a_call__.2} parent=0 // pred_check_branch
    %311 = sbr.rel (0) target = $region13
  $region12: #{a_call__.2} parent=0 // pred_region
    _
  $region13: #{a_call__.2} parent=0 // pred_fallthru
    _
  // Predicated region
  $region14: #{a_call__.2} parent=0 // pred_check
    _
  $region15: #{a_call__.2} parent=0 // pred_check_branch
    %313 = sbr.rel (0) target = $region17
  $region16: #{a_call__.2} parent=0 // pred_region
    _
  $region17: #{a_call__.2} parent=0 // pred_fallthru
    _

// kernel: a_call__.3
$region0: #{a_call__.3}
  #allocation0 [shape = 'u32[]', space=smem, size = 0x4, offset = 0x4, fixed_abs, tag = 'smem constant byte address 0x4 - core index']
  #allocation1 [shape = 'u32[144,128]{1,0:T(1,128)}', space=vmem, size = 0x12000, scoped, tag = 'internal scratch']
  #allocation2 [shape = 'bf16[256,128]{1,0:T(16,128)(2,1)}', space=vmem, size = 0x10000, scoped, tag = 'scratch operand']
  %s0 = inlined_call_operand.vmem [shape: bf16[384,128], index: 0, kind: input, shape index: {}, may-alias: {0,1}]
  %s1 = inlined_call_operand.vmem [shape: bf16[384,128], index: 1, kind: input, shape index: {}, may-alias: {0,1}]
  %s2 = inlined_call_operand.vmem [shape: bf16[9,128,128], index: 2, kind: input, shape index: {}]
  %s3 = inlined_call_operand.vmem [shape: bf16[256,4], index: 3, kind: input, shape index: {}]
  %s4 = inlined_call_operand.vmem [shape: bf16[4,128], index: 4, kind: input, shape index: {}]
  %s5 = inlined_call_operand.vmem [shape: bf16[256,128], index: 5, kind: output, shape index: {}]
  %s6 = sld [smem:[#allocation0]]
  $region53: #{a_call__.3} parent=0
    _
  %s8 = ssub.s32 1, %s6
  %s9 = scalar_select 0, %s8, %s6
  loop: start=0, step=1, limit=4
  $region2: #{a_call__.3} parent=0 // loop_pre_header
    _
  $region3: #{a_call__.3} parent=0 // loop_header
    %s11 = sphi 0, %s15
    %p12 = scmp.ge.s32.totalorder %s11, 4
    %s21 = sphi 0, %s23
    %s24 = sphi 0, %s21
    %s25 = sphi 0, %s24
    %s41 = sphi 0, %s25
    %s49 = sphi 0, %s51
    %s52 = sphi 0, %s49
    %s53 = sphi 0, %s52
    %s69 = sphi 0, %s53
    %s73 = sphi 0, %s73
    %s75 = sphi 0, %s73
    %s76 = sphi 0, %s75
    %s90 = sphi 0, %s76
    %s96 = sphi 0, %s98
    %s99 = sphi 0, %s96
    %s100 = sphi 0, %s99
    %s116 = sphi 0, %s100
    %s120 = sphi 0, %s120
    %s122 = sphi 0, %s120
    %s123 = sphi 0, %s122
    %s137 = sphi 0, %s123
    %s143 = sphi 0, %s145
    %s146 = sphi 0, %s143
    %s147 = sphi 0, %s146
    %s163 = sphi 0, %s147
  $region4: #{a_call__.3} parent=0 // loop_header_branch
    %14 = sbr.rel (%p12) target = $region8
  $region5: #{a_call__.3} parent=0 // loop_body
    %s16 = ssub.s32 %s11, 1
    %s17 = ssub.s32 %s11, 2
    %s18 = sadd.s32 %s11, 1
    %s19 = ssub.s32 %s11, %s18
    %p20 = scmp.eq.s32.totalorder %s19, 0
    %s22 = sadd.s32 %s21, 1
    %s23 = scalar_select %p20, %s21, %s22
    %p26 = pneg %p20
    %p27 = scmp.eq.s32.totalorder %s11, 1
    %p28 = por %p26, %p27
    %p29 = scmp.ne.s32.totalorder %s21, %s24
    %p30 = scmp.eq.s32.totalorder %s11, 0
    %p31 = por %p29, %p30
    %p32 = scmp.ne.s32.totalorder %s21, %s24
    %p33 = scmp.eq.s32.totalorder %s16, 1
    %p34 = por %p32, %p33
    %p35 = scmp.ne.s32.totalorder %s24, %s25
    %p36 = scmp.eq.s32.totalorder %s16, 0
    %p37 = por %p35, %p36
    %p38 = scmp.ne.s32.totalorder %s24, %s25
    %p39 = scmp.eq.s32.totalorder %s17, 1
    %p40 = por %p38, %p39
    %p42 = scmp.ne.s32.totalorder %s25, %s41
    %p43 = scmp.eq.s32.totalorder %s17, 0
    %p44 = por %p42, %p43
    %s45 = sadd.s32 %s11, 1
    %s46 = sadd.s32 %s18, 1
    %s47 = ssub.s32 %s45, %s46
    %p48 = scmp.eq.s32.totalorder %s47, 0
    %s50 = sadd.s32 %s49, 1
    %s51 = scalar_select %p48, %s49, %s50
    %p54 = pneg %p48
    %p55 = scmp.eq.s32.totalorder %s11, 1
    %p56 = por %p54, %p55
    %p57 = scmp.ne.s32.totalorder %s49, %s52
    %p58 = scmp.eq.s32.totalorder %s11, 0
    %p59 = por %p57, %p58
    %p60 = scmp.ne.s32.totalorder %s49, %s52
    %p61 = scmp.eq.s32.totalorder %s16, 1
    %p62 = por %p60, %p61
    %p63 = scmp.ne.s32.totalorder %s52, %s53
    %p64 = scmp.eq.s32.totalorder %s16, 0
    %p65 = por %p63, %p64
    %p66 = scmp.ne.s32.totalorder %s52, %s53
    %p67 = scmp.eq.s32.totalorder %s17, 1
    %p68 = por %p66, %p67
    %p70 = scmp.ne.s32.totalorder %s53, %s69
    %p71 = scmp.eq.s32.totalorder %s17, 0
    %p72 = por %p70, %p71
    %s74 = sadd.s32 %s73, 1
    %p77 = scmp.eq.s32.totalorder %s11, 1
    %p78 = scmp.ne.s32.totalorder %s73, %s75
    %p79 = scmp.eq.s32.totalorder %s11, 0
    %p80 = por %p78, %p79
    %p81 = scmp.ne.s32.totalorder %s73, %s75
    %p82 = scmp.eq.s32.totalorder %s16, 1
    %p83 = por %p81, %p82
    %p84 = scmp.ne.s32.totalorder %s75, %s76
    %p85 = scmp.eq.s32.totalorder %s16, 0
    %p86 = por %p84, %p85
    %p87 = scmp.ne.s32.totalorder %s75, %s76
    %p88 = scmp.eq.s32.totalorder %s17, 1
    %p89 = por %p87, %p88
    %p91 = scmp.ne.s32.totalorder %s76, %s90
    %p92 = scmp.eq.s32.totalorder %s17, 0
    %p93 = por %p91, %p92
    %s94 = ssub.s32 %s11, %s18
    %p95 = scmp.eq.s32.totalorder %s94, 0
    %s97 = sadd.s32 %s96, 1
    %s98 = scalar_select %p95, %s96, %s97
    %p101 = pneg %p95
    %p102 = scmp.eq.s32.totalorder %s11, 1
    %p103 = por %p101, %p102
    %p104 = scmp.ne.s32.totalorder %s96, %s99
    %p105 = scmp.eq.s32.totalorder %s11, 0
    %p106 = por %p104, %p105
    %p107 = scmp.ne.s32.totalorder %s96, %s99
    %p108 = scmp.eq.s32.totalorder %s16, 1
    %p109 = por %p107, %p108
    %p110 = scmp.ne.s32.totalorder %s99, %s100
    %p111 = scmp.eq.s32.totalorder %s16, 0
    %p112 = por %p110, %p111
    %p113 = scmp.ne.s32.totalorder %s99, %s100
    %p114 = scmp.eq.s32.totalorder %s17, 1
    %p115 = por %p113, %p114
    %p117 = scmp.ne.s32.totalorder %s100, %s116
    %p118 = scmp.eq.s32.totalorder %s17, 0
    %p119 = por %p117, %p118
    %s121 = sadd.s32 %s120, 1
    %p124 = scmp.eq.s32.totalorder %s11, 1
    %p125 = scmp.ne.s32.totalorder %s120, %s122
    %p126 = scmp.eq.s32.totalorder %s11, 0
    %p127 = por %p125, %p126
    %p128 = scmp.ne.s32.totalorder %s120, %s122
    %p129 = scmp.eq.s32.totalorder %s16, 1
    %p130 = por %p128, %p129
    %p131 = scmp.ne.s32.totalorder %s122, %s123
    %p132 = scmp.eq.s32.totalorder %s16, 0
    %p133 = por %p131, %p132
    %p134 = scmp.ne.s32.totalorder %s122, %s123
    %p135 = scmp.eq.s32.totalorder %s17, 1
    %p136 = por %p134, %p135
    %p138 = scmp.ne.s32.totalorder %s123, %s137
    %p139 = scmp.eq.s32.totalorder %s17, 0
    %p140 = por %p138, %p139
    %s141 = ssub.s32 %s11, %s18
    %p142 = scmp.eq.s32.totalorder %s141, 0
    %s144 = sadd.s32 %s143, 1
    %s145 = scalar_select %p142, %s143, %s144
    %p148 = pneg %p142
    %p149 = scmp.eq.s32.totalorder %s11, 1
    %p150 = por %p148, %p149
    %p151 = scmp.ne.s32.totalorder %s143, %s146
    %p152 = scmp.eq.s32.totalorder %s11, 0
    %p153 = por %p151, %p152
    %p154 = scmp.ne.s32.totalorder %s143, %s146
    %p155 = scmp.eq.s32.totalorder %s16, 1
    %p156 = por %p154, %p155
    %p157 = scmp.ne.s32.totalorder %s146, %s147
    %p158 = scmp.eq.s32.totalorder %s16, 0
    %p159 = por %p157, %p158
    %p160 = scmp.ne.s32.totalorder %s146, %s147
    %p161 = scmp.eq.s32.totalorder %s17, 1
    %p162 = por %p160, %p161
    %p164 = scmp.ne.s32.totalorder %s147, %s163
    %p165 = scmp.eq.s32.totalorder %s17, 0
    %p166 = por %p164, %p165
    %p167 = scmp.le.s32.totalorder 1, %s11
    %p168 = scmp.lt.s32.totalorder %s11, 3
    %p169 = pnand %p167, %p168
    %p170 = pneg %p169
    // Predicated region
    $region9: #{a_call__.3} parent=5 // pred_check
      _
    $region10: #{a_call__.3} parent=5 // pred_check_branch
      %172 = sbr.rel (%p169) target = $region12
    $region11: #{a_call__.3} parent=5 // pred_region
      %s173 = ssub.s32 %s11, 1
      // Predicated region
      $region13: #{a_call__.3} parent=11 // pred_check
        %p174 = pneg %p86
      $region14: #{a_call__.3} parent=11 // pred_check_branch
        %176 = sbr.rel (%p174) target = $region16
      $region15: #{a_call__.3} parent=11 // pred_region
        _
      $region16: #{a_call__.3} parent=11 // pred_fallthru
        _
      // Predicated region
      $region17: #{a_call__.3} parent=11 // pred_check
        %p177 = pneg %p133
      $region18: #{a_call__.3} parent=11 // pred_check_branch
        %179 = sbr.rel (%p177) target = $region20
      $region19: #{a_call__.3} parent=11 // pred_region
        _
      $region20: #{a_call__.3} parent=11 // pred_fallthru
        _
    $region12: #{a_call__.3} parent=5 // pred_fallthru
      _
    %p180 = scmp.lt.s32.totalorder %s11, 2
    // Predicated region
    $region21: #{a_call__.3} parent=5 // pred_check
      %p181 = pneg %p180
    $region22: #{a_call__.3} parent=5 // pred_check_branch
      %183 = sbr.rel (%p181) target = $region24
    $region23: #{a_call__.3} parent=5 // pred_region
      // Predicated region
      $region25: #{a_call__.3} parent=23 // pred_check
        %p184 = pneg %p31
      $region26: #{a_call__.3} parent=23 // pred_check_branch
        %186 = sbr.rel (%p184) target = $region28
      $region27: #{a_call__.3} parent=23 // pred_region
        %s187 = smul.u32 16, %s11
        %p188 = scmp.lt.s32.totalorder %s187, 47
        %s189 = scalar_select %p188, %s187, 47
        %s190 = smul.addr %s189, 4
        %s191 = scalar_lea.vmem %s0, %s190
        %s192 = smul.u32 16, %s11
      $region28: #{a_call__.3} parent=23 // pred_fallthru
        _
      // Predicated region
      $region29: #{a_call__.3} parent=23 // pred_check
        %p193 = pneg %p59
      $region30: #{a_call__.3} parent=23 // pred_check_branch
        %195 = sbr.rel (%p193) target = $region32
      $region31: #{a_call__.3} parent=23 // pred_region
        %s196 = sadd.s32 %s11, 1
        %s197 = smul.u32 16, %s196
        %p198 = scmp.lt.s32.totalorder %s197, 47
        %s199 = scalar_select %p198, %s197, 47
        %s200 = smul.addr %s199, 4
        %s201 = scalar_lea.vmem %s1, %s200
        %s202 = sadd.s32 %s11, 1
        %s203 = smul.u32 16, %s202
      $region32: #{a_call__.3} parent=23 // pred_fallthru
        _
      // Predicated region
      $region33: #{a_call__.3} parent=23 // pred_check
        %p204 = pneg %p106
      $region34: #{a_call__.3} parent=23 // pred_check_branch
        %206 = sbr.rel (%p204) target = $region36
      $region35: #{a_call__.3} parent=23 // pred_region
        %s207 = smul.u32 16, %s11
        %p208 = scmp.lt.s32.totalorder %s207, 31
        %s209 = scalar_select %p208, %s207, 31
        %s210 = smul.addr %s209, 4
        %s211 = scalar_lea.vmem %s3, %s210
        %s212 = smul.u32 16, %s11
      $region36: #{a_call__.3} parent=23 // pred_fallthru
        _
    $region24: #{a_call__.3} parent=5 // pred_fallthru
      _
    %p213 = scmp.le.s32.totalorder 1, %s11
    %p214 = scmp.lt.s32.totalorder %s11, 3
    %p215 = pnand %p213, %p214
    %p216 = pneg %p215
    // Predicated region
    $region37: #{a_call__.3} parent=5 // pred_check
      _
    $region38: #{a_call__.3} parent=5 // pred_check_branch
      %218 = sbr.rel (%p215) target = $region40
    $region39: #{a_call__.3} parent=5 // pred_region
      %s219 = ssub.s32 %s11, 1
      %s220 = smul.u32 16, %s16
      %p221 = scmp.lt.s32.totalorder %s220, 47
      %s222 = scalar_select %p221, %s220, 47
      %s223 = smul.addr %s222, 4
      %s224 = scalar_lea.vmem %s0, %s223
      %p225 = pneg %p37
      %p226 = pneg %p34
      %s227 = sadd.s32 %s16, 1
      %s228 = smul.u32 16, %s227
      %p229 = scmp.lt.s32.totalorder %s228, 47
      %s230 = scalar_select %p229, %s228, 47
      %s231 = smul.addr %s230, 4
      %s232 = scalar_lea.vmem %s1, %s231
      %p233 = pneg %p65
      %p234 = pneg %p62
      %p235 = pneg %p86
      %p236 = pneg %p83
      %s237 = smul.u32 16, %s16
      %p238 = scmp.lt.s32.totalorder %s237, 31
      %s239 = scalar_select %p238, %s237, 31
      %s240 = smul.addr %s239, 4
      %s241 = scalar_lea.vmem %s3, %s240
      %p242 = pneg %p112
      %p243 = pneg %p109
      %p244 = pneg %p133
      %p245 = pneg %p130
      %p246 = pneg %p159
      %p247 = pneg %p156
      %s248 = smul.u32 16, %s16
      %p249 = scmp.lt.s32.totalorder %s248, 31
      %s250 = scalar_select %p249, %s248, 31
      %s251 = smul.addr %s250, 4
      %s252 = scalar_lea.vmem %s5, %s251
      %s253 = smul.u32 16, %s16
      %p254 = scmp.lt.s32.totalorder %s253, 47
      %s255 = scalar_select %p254, %s253, 47
      %s256 = smul.addr %s255, 4
      %s257 = scalar_lea.vmem %s0, %s256
      %s258 = smul.u32 16, %s16
      %s259 = sadd.s32 %s16, 1
      %s260 = smul.u32 16, %s259
      %p261 = scmp.lt.s32.totalorder %s260, 47
      %s262 = scalar_select %p261, %s260, 47
      %s263 = smul.addr %s262, 4
      %s264 = scalar_lea.vmem %s1, %s263
      %s265 = sadd.s32 %s16, 1
      %s266 = smul.u32 16, %s265
      %s267 = smul.u32 16, %s16
      %p268 = scmp.lt.s32.totalorder %s267, 31
      %s269 = scalar_select %p268, %s267, 31
      %s270 = smul.addr %s269, 4
      %s271 = scalar_lea.vmem %s3, %s270
      %s272 = smul.u32 16, %s16
      %s273 = smul.u32 16, %s16
      %p274 = scmp.lt.s32.totalorder %s273, 31
      %s275 = scalar_select %p274, %s273, 31
      %s276 = smul.addr %s275, 4
      %s277 = scalar_lea.vmem %s5, %s276
      %s278 = smul.u32 16, %s16
      %v280 = vld [vmem:[%s257] sm:$0xf]
      %v281 = vld [vmem:[%s257 + $0x4] sm:$0xf]
      %v282 = vld [vmem:[%s257 + $0x8] sm:$0xf]
      %v283 = vld [vmem:[%s257 + $0xc] sm:$0xf]
      %v284 = vld [vmem:[%s257 + $0x10] sm:$0xf]
      %v285 = vld [vmem:[%s257 + $0x14] sm:$0xf]
      %v286 = vld [vmem:[%s257 + $0x18] sm:$0xf]
      %v287 = vld [vmem:[%s257 + $0x1c] sm:$0xf]
      %v288 = vld [vmem:[%s257 + $0x20] sm:$0xf]
      %v289 = vld [vmem:[%s257 + $0x24] sm:$0xf]
      %v290 = vld [vmem:[%s257 + $0x28] sm:$0xf]
      %v291 = vld [vmem:[%s257 + $0x2c] sm:$0xf]
      %v292 = vld [vmem:[%s257 + $0x30] sm:$0xf]
      %v293 = vld [vmem:[%s257 + $0x34] sm:$0xf]
      %v294 = vld [vmem:[%s257 + $0x38] sm:$0xf]
      %v295 = vld [vmem:[%s257 + $0x3c] sm:$0xf]
      %v312 = vunpack.c.l.b16 %v280
      %v313 = vunpack.c.l.b16 %v281
      %v314 = vunpack.c.l.b16 %v282
      %v315 = vunpack.c.l.b16 %v283
      %v316 = vunpack.c.l.b16 %v284
      %v317 = vunpack.c.l.b16 %v285
      %v318 = vunpack.c.l.b16 %v286
      %v319 = vunpack.c.l.b16 %v287
      %v320 = vunpack.c.l.b16 %v288
      %v321 = vunpack.c.l.b16 %v289
      %v322 = vunpack.c.l.b16 %v290
      %v323 = vunpack.c.l.b16 %v291
      %v324 = vunpack.c.l.b16 %v292
      %v325 = vunpack.c.l.b16 %v293
      %v326 = vunpack.c.l.b16 %v294
      %v327 = vunpack.c.l.b16 %v295
      %v328 = vpack.c.b16 %v313, %v312
      %v329 = vpack.c.b16 %v315, %v314
      %v330 = vpack.c.b16 %v317, %v316
      %v331 = vpack.c.b16 %v319, %v318
      %v332 = vpack.c.b16 %v321, %v320
      %v333 = vpack.c.b16 %v323, %v322
      %v334 = vpack.c.b16 %v325, %v324
      %v335 = vpack.c.b16 %v327, %v326
      %344 = vst [vmem:[#allocation2] sm:$0xff] %v328
      %345 = vst [vmem:[#allocation2 + $0x8] sm:$0xff] %v329
      %346 = vst [vmem:[#allocation2 + $0x10] sm:$0xff] %v330
      %347 = vst [vmem:[#allocation2 + $0x18] sm:$0xff] %v331
      %348 = vst [vmem:[#allocation2 + $0x20] sm:$0xff] %v332
      %349 = vst [vmem:[#allocation2 + $0x28] sm:$0xff] %v333
      %350 = vst [vmem:[#allocation2 + $0x30] sm:$0xff] %v334
      %351 = vst [vmem:[#allocation2 + $0x38] sm:$0xff] %v335
      %v352 = vld [vmem:[%s264] sm:$0xf]
      %v353 = vld [vmem:[%s264 + $0x4] sm:$0xf]
      %v354 = vld [vmem:[%s264 + $0x8] sm:$0xf]
      %v355 = vld [vmem:[%s264 + $0xc] sm:$0xf]
      %v356 = vld [vmem:[%s264 + $0x10] sm:$0xf]
      %v357 = vld [vmem:[%s264 + $0x14] sm:$0xf]
      %v358 = vld [vmem:[%s264 + $0x18] sm:$0xf]
      %v359 = vld [vmem:[%s264 + $0x1c] sm:$0xf]
      %v360 = vld [vmem:[%s264 + $0x20] sm:$0xf]
      %v361 = vld [vmem:[%s264 + $0x24] sm:$0xf]
      %v362 = vld [vmem:[%s264 + $0x28] sm:$0xf]
      %v363 = vld [vmem:[%s264 + $0x2c] sm:$0xf]
      %v364 = vld [vmem:[%s264 + $0x30] sm:$0xf]
      %v365 = vld [vmem:[%s264 + $0x34] sm:$0xf]
      %v366 = vld [vmem:[%s264 + $0x38] sm:$0xf]
      %v367 = vld [vmem:[%s264 + $0x3c] sm:$0xf]
      %v384 = vunpack.c.l.b16 %v352
      %v385 = vunpack.c.l.b16 %v353
      %v386 = vunpack.c.l.b16 %v354
      %v387 = vunpack.c.l.b16 %v355
      %v388 = vunpack.c.l.b16 %v356
      %v389 = vunpack.c.l.b16 %v357
      %v390 = vunpack.c.l.b16 %v358
      %v391 = vunpack.c.l.b16 %v359
      %v392 = vunpack.c.l.b16 %v360
      %v393 = vunpack.c.l.b16 %v361
      %v394 = vunpack.c.l.b16 %v362
      %v395 = vunpack.c.l.b16 %v363
      %v396 = vunpack.c.l.b16 %v364
      %v397 = vunpack.c.l.b16 %v365
      %v398 = vunpack.c.l.b16 %v366
      %v399 = vunpack.c.l.b16 %v367
      %v400 = vpack.c.b16 %v385, %v384
      %v401 = vpack.c.b16 %v387, %v386
      %v402 = vpack.c.b16 %v389, %v388
      %v403 = vpack.c.b16 %v391, %v390
      %v404 = vpack.c.b16 %v393, %v392
      %v405 = vpack.c.b16 %v395, %v394
      %v406 = vpack.c.b16 %v397, %v396
      %v407 = vpack.c.b16 %v399, %v398
      %416 = vst [vmem:[#allocation2 + $0x40] sm:$0xff] %v400
      %417 = vst [vmem:[#allocation2 + $0x48] sm:$0xff] %v401
      %418 = vst [vmem:[#allocation2 + $0x50] sm:$0xff] %v402
      %419 = vst [vmem:[#allocation2 + $0x58] sm:$0xff] %v403
      %420 = vst [vmem:[#allocation2 + $0x60] sm:$0xff] %v404
      %421 = vst [vmem:[#allocation2 + $0x68] sm:$0xff] %v405
      %422 = vst [vmem:[#allocation2 + $0x70] sm:$0xff] %v406
      %423 = vst [vmem:[#allocation2 + $0x78] sm:$0xff] %v407
      %v424 = vld [vmem:[#allocation2] sm:$0xff]
      %v425 = vld [vmem:[#allocation2 + $0x8] sm:$0xff]
      %v426 = vld [vmem:[#allocation2 + $0x10] sm:$0xff]
      %v427 = vld [vmem:[#allocation2 + $0x18] sm:$0xff]
      %v428 = vld [vmem:[#allocation2 + $0x20] sm:$0xff]
      %v429 = vld [vmem:[#allocation2 + $0x28] sm:$0xff]
      %v430 = vld [vmem:[#allocation2 + $0x30] sm:$0xff]
      %v431 = vld [vmem:[#allocation2 + $0x38] sm:$0xff]
      %v432 = vld [vmem:[%s2] sm:$0xf]
      %v433 = vld [vmem:[%s2 + $0x4] sm:$0xf]
      %v434 = vld [vmem:[%s2 + $0x8] sm:$0xf]
      %v435 = vld [vmem:[%s2 + $0xc] sm:$0xf]
      %v436 = vld [vmem:[%s2 + $0x10] sm:$0xf]
      %v437 = vld [vmem:[%s2 + $0x14] sm:$0xf]
      %v438 = vld [vmem:[%s2 + $0x18] sm:$0xf]
      %v439 = vld [vmem:[%s2 + $0x1c] sm:$0xf]
      %v440 = vld [vmem:[%s2 + $0x20] sm:$0xf]
      %v441 = vld [vmem:[%s2 + $0x24] sm:$0xf]
      %v442 = vld [vmem:[%s2 + $0x28] sm:$0xf]
      %v443 = vld [vmem:[%s2 + $0x2c] sm:$0xf]
      %v444 = vld [vmem:[%s2 + $0x30] sm:$0xf]
      %v445 = vld [vmem:[%s2 + $0x34] sm:$0xf]
      %v446 = vld [vmem:[%s2 + $0x38] sm:$0xf]
      %v447 = vld [vmem:[%s2 + $0x3c] sm:$0xf]
      %v448 = vld [vmem:[#allocation2 + $0x40] sm:$0x1]
      %s449 = scalar_lea.vmem %s2, 64
      %v450 = vld [vmem:[%s449] sm:$0xf]
      %v451 = vld [vmem:[%s449 + $0x4] sm:$0xf]
      %v452 = vld [vmem:[%s449 + $0x8] sm:$0xf]
      %v453 = vld [vmem:[%s449 + $0xc] sm:$0xf]
      %v454 = vld [vmem:[%s449 + $0x10] sm:$0xf]
      %v455 = vld [vmem:[%s449 + $0x14] sm:$0xf]
      %v456 = vld [vmem:[%s449 + $0x18] sm:$0xf]
      %v457 = vld [vmem:[%s449 + $0x1c] sm:$0xf]
      %v458 = vld [vmem:[%s449 + $0x20] sm:$0xf]
      %v459 = vld [vmem:[%s449 + $0x24] sm:$0xf]
      %v460 = vld [vmem:[%s449 + $0x28] sm:$0xf]
      %v461 = vld [vmem:[%s449 + $0x2c] sm:$0xf]
      %v462 = vld [vmem:[%s449 + $0x30] sm:$0xf]
      %v463 = vld [vmem:[%s449 + $0x34] sm:$0xf]
      %v464 = vld [vmem:[%s449 + $0x38] sm:$0xf]
      %v465 = vld [vmem:[%s449 + $0x3c] sm:$0xf]
      %vm466 = vsmask.f32 7424
      %v468 = vshrl.u32 %v424, 16
      %v470 = vshll.u32 %v424, 16
      %v472 = vrot.slane %v470, 1
      %v473 = vor.u32 %v468, %v472
      %v475 = vshll.u32 %v425, 16
      %v477 = vrot.slane %v475, 1
      %v478 = vsel %vm466, %v473, %v477
      %v479 = vshrl.u32 %v425, 16
      %v481 = vor.u32 %v479, %v477
      %v483 = vshll.u32 %v426, 16
      %v485 = vrot.slane %v483, 1
      %v486 = vsel %vm466, %v481, %v485
      %v487 = vshrl.u32 %v426, 16
      %v489 = vor.u32 %v487, %v485
      %v491 = vshll.u32 %v427, 16
      %v493 = vrot.slane %v491, 1
      %v494 = vsel %vm466, %v489, %v493
      %v495 = vshrl.u32 %v427, 16
      %v497 = vor.u32 %v495, %v493
      %v499 = vshll.u32 %v428, 16
      %v501 = vrot.slane %v499, 1
      %v502 = vsel %vm466, %v497, %v501
      %v503 = vshrl.u32 %v428, 16
      %v505 = vor.u32 %v503, %v501
      %v507 = vshll.u32 %v429, 16
      %v509 = vrot.slane %v507, 1
      %v510 = vsel %vm466, %v505, %v509
      %v511 = vshrl.u32 %v429, 16
      %v513 = vor.u32 %v511, %v509
      %v515 = vshll.u32 %v430, 16
      %v517 = vrot.slane %v515, 1
      %v518 = vsel %vm466, %v513, %v517
      %v519 = vshrl.u32 %v430, 16
      %v521 = vor.u32 %v519, %v517
      %v523 = vshll.u32 %v431, 16
      %v525 = vrot.slane %v523, 1
      %v526 = vsel %vm466, %v521, %v525
      %v527 = vshrl.u32 %v431, 16
      %v529 = vor.u32 %v527, %v525
      %v531 = vshll.u32 %v448, 16
      %v533 = vrot.slane %v531, 1
      %v534 = vsel %vm466, %v529, %v533
      %v559 = vunpack.c.l.b16 %v450
      %v560 = vunpack.c.l.b16 %v451
      %v561 = vunpack.c.l.b16 %v452
      %v562 = vunpack.c.l.b16 %v453
      %v563 = vunpack.c.l.b16 %v454
      %v564 = vunpack.c.l.b16 %v455
      %v565 = vunpack.c.l.b16 %v456
      %v566 = vunpack.c.l.b16 %v457
      %v567 = vunpack.c.l.b16 %v458
      %v568 = vunpack.c.l.b16 %v459
      %v569 = vunpack.c.l.b16 %v460
      %v570 = vunpack.c.l.b16 %v461
      %v571 = vunpack.c.l.b16 %v462
      %v572 = vunpack.c.l.b16 %v463
      %v573 = vunpack.c.l.b16 %v464
      %v574 = vunpack.c.l.b16 %v465
      %v575 = vpack.c.b16 %v560, %v559
      %v576 = vpack.c.b16 %v562, %v561
      %v577 = vpack.c.b16 %v564, %v563
      %v578 = vpack.c.b16 %v566, %v565
      %v579 = vpack.c.b16 %v568, %v567
      %v580 = vpack.c.b16 %v570, %v569
      %v581 = vpack.c.b16 %v572, %v571
      %v582 = vpack.c.b16 %v574, %v573
      %591 = vmatprep.subr.bf16.mxu0 0
      %592 = vmatpush1.bf16.msra.mxu0 %v575
      %593 = vmatprep.subr.bf16.mxu0 0
      %594 = vmatpush1.bf16.msra.mxu0 %v576
      %595 = vmatprep.subr.bf16.mxu0 0
      %596 = vmatpush1.bf16.msra.mxu0 %v577
      %597 = vmatprep.subr.bf16.mxu0 0
      %598 = vmatpush1.bf16.msra.mxu0 %v578
      %599 = vmatprep.subr.bf16.mxu0 0
      %600 = vmatpush1.bf16.msra.mxu0 %v579
      %601 = vmatprep.subr.bf16.mxu0 0
      %602 = vmatpush1.bf16.msra.mxu0 %v580
      %603 = vmatprep.subr.bf16.mxu0 0
      %604 = vmatpush1.bf16.msra.mxu0 %v581
      %605 = vmatprep.subr.bf16.mxu0 0
      %606 = vmatpush1.bf16.msra.mxu0 %v582
      %607 = vmatprep.subr.bf16.mxu0 0
      %608 = vmatpush1.bf16.msra.mxu0 0
      %609 = vmatprep.subr.bf16.mxu0 0
      %610 = vmatpush1.bf16.msra.mxu0 0
      %611 = vmatprep.subr.bf16.mxu0 0
      %612 = vmatpush1.bf16.msra.mxu0 0
      %613 = vmatprep.subr.bf16.mxu0 0
      %614 = vmatpush1.bf16.msra.mxu0 0
      %615 = vmatprep.subr.bf16.mxu0 0
      %616 = vmatpush1.bf16.msra.mxu0 0
      %617 = vmatprep.subr.bf16.mxu0 0
      %618 = vmatpush1.bf16.msra.mxu0 0
      %619 = vmatprep.subr.bf16.mxu0 0
      %620 = vmatpush1.bf16.msra.mxu0 0
      %621 = vmatprep.subr.bf16.mxu0 0
      %622 = vmatpush1.bf16.msra.mxu0 0
      %623 = vmatprep.mubr.bf16.mxu0 0
      %624 = vmatmul.mubr.bf16.gmra.mrb[0].mxu0 %v478
      %v625 = vpop.f32.mrb[0].mxu0
      %v626 = vadd.f32 0.0, %v625
      %v627 = vpop.f32.mrb[0].mxu0
      %v628 = vpop.f32.mrb[0].mxu0
      %v629 = vadd.f32 0.0, %v628
      %v630 = vpop.f32.mrb[0].mxu0
      %631 = vmatprep.mubr.bf16.mxu0 0
      %632 = vmatmul.mubr.bf16.gmra.mrb[0].mxu0 %v486
      %v633 = vpop.f32.mrb[0].mxu0
      %v634 = vadd.f32 0.0, %v633
      %v635 = vpop.f32.mrb[0].mxu0
      %v636 = vpop.f32.mrb[0].mxu0
      %v637 = vadd.f32 0.0, %v636
      %v638 = vpop.f32.mrb[0].mxu0
      %639 = vmatprep.mubr.bf16.mxu0 0
      %640 = vmatmul.mubr.bf16.gmra.mrb[0].mxu0 %v494
      %v641 = vpop.f32.mrb[0].mxu0
      %v642 = vadd.f32 0.0, %v641
      %v643 = vpop.f32.mrb[0].mxu0
      %v644 = vpop.f32.mrb[0].mxu0
      %v645 = vadd.f32 0.0, %v644
      %v646 = vpop.f32.mrb[0].mxu0
      %647 = vmatprep.mubr.bf16.mxu0 0
      %648 = vmatmul.mubr.bf16.gmra.mrb[0].mxu0 %v502
      %v649 = vpop.f32.mrb[0].mxu0
      %v650 = vadd.f32 0.0, %v649
      %v651 = vpop.f32.mrb[0].mxu0
      %v652 = vpop.f32.mrb[0].mxu0
      %v653 = vadd.f32 0.0, %v652
      %v654 = vpop.f32.mrb[0].mxu0
      %655 = vmatprep.mubr.bf16.mxu0 0
      %656 = vmatmul.mubr.bf16.gmra.mrb[0].mxu0 %v510
      %v657 = vpop.f32.mrb[0].mxu0
      %v658 = vadd.f32 0.0, %v657
      %v659 = vpop.f32.mrb[0].mxu0
      %v660 = vpop.f32.mrb[0].mxu0
      %v661 = vadd.f32 0.0, %v660
      %v662 = vpop.f32.mrb[0].mxu0
      %663 = vmatprep.mubr.bf16.mxu0 0
      %664 = vmatmul.mubr.bf16.gmra.mrb[0].mxu0 %v518
      %v665 = vpop.f32.mrb[0].mxu0
      %v666 = vadd.f32 0.0, %v665
      %v667 = vpop.f32.mrb[0].mxu0
      %v668 = vpop.f32.mrb[0].mxu0
      %v669 = vadd.f32 0.0, %v668
      %v670 = vpop.f32.mrb[0].mxu0
      %671 = vmatprep.mubr.bf16.mxu0 0
      %672 = vmatmul.mubr.bf16.gmra.mrb[0].mxu0 %v526
      %v673 = vpop.f32.mrb[0].mxu0
      %v674 = vadd.f32 0.0, %v673
      %v675 = vpop.f32.mrb[0].mxu0
      %v676 = vpop.f32.mrb[0].mxu0
      %v677 = vadd.f32 0.0, %v676
      %v678 = vpop.f32.mrb[0].mxu0
      %679 = vmatprep.mubr.bf16.mxu0 0
      %680 = vmatmul.mubr.bf16.gmra.mrb[0].mxu0 %v534
      %v681 = vpop.f32.mrb[0].mxu0
      %v682 = vadd.f32 0.0, %v681
      %v683 = vpop.f32.mrb[0].mxu0
      %v684 = vpop.f32.mrb[0].mxu0
      %v685 = vadd.f32 0.0, %v684
      %v686 = vpop.f32.mrb[0].mxu0
      %687 = vdwg.mxu0
      %v704 = vunpack.c.l.b16 %v432
      %v705 = vunpack.c.l.b16 %v433
      %v706 = vunpack.c.l.b16 %v434
      %v707 = vunpack.c.l.b16 %v435
      %v708 = vunpack.c.l.b16 %v436
      %v709 = vunpack.c.l.b16 %v437
      %v710 = vunpack.c.l.b16 %v438
      %v711 = vunpack.c.l.b16 %v439
      %v712 = vunpack.c.l.b16 %v440
      %v713 = vunpack.c.l.b16 %v441
      %v714 = vunpack.c.l.b16 %v442
      %v715 = vunpack.c.l.b16 %v443
      %v716 = vunpack.c.l.b16 %v444
      %v717 = vunpack.c.l.b16 %v445
      %v718 = vunpack.c.l.b16 %v446
      %v719 = vunpack.c.l.b16 %v447
      %v720 = vpack.c.b16 %v705, %v704
      %v721 = vpack.c.b16 %v707, %v706
      %v722 = vpack.c.b16 %v709, %v708
      %v723 = vpack.c.b16 %v711, %v710
      %v724 = vpack.c.b16 %v713, %v712
      %v725 = vpack.c.b16 %v715, %v714
      %v726 = vpack.c.b16 %v717, %v716
      %v727 = vpack.c.b16 %v719, %v718
      %736 = vmatprep.subr.bf16.mxu0 0
      %737 = vmatpush1.bf16.msra.mxu0 %v720
      %738 = vmatprep.subr.bf16.mxu0 0
      %739 = vmatpush1.bf16.msra.mxu0 %v721
      %740 = vmatprep.subr.bf16.mxu0 0
      %741 = vmatpush1.bf16.msra.mxu0 %v722
      %742 = vmatprep.subr.bf16.mxu0 0
      %743 = vmatpush1.bf16.msra.mxu0 %v723
      %744 = vmatprep.subr.bf16.mxu0 0
      %745 = vmatpush1.bf16.msra.mxu0 %v724
      %746 = vmatprep.subr.bf16.mxu0 0
      %747 = vmatpush1.bf16.msra.mxu0 %v725
      %748 = vmatprep.subr.bf16.mxu0 0
      %749 = vmatpush1.bf16.msra.mxu0 %v726
      %750 = vmatprep.subr.bf16.mxu0 0
      %751 = vmatpush1.bf16.msra.mxu0 %v727
      %752 = vmatprep.subr.bf16.mxu0 0
      %753 = vmatpush1.bf16.msra.mxu0 0
      %754 = vmatprep.subr.bf16.mxu0 0
      %755 = vmatpush1.bf16.msra.mxu0 0
      %756 = vmatprep.subr.bf16.mxu0 0
      %757 = vmatpush1.bf16.msra.mxu0 0
      %758 = vmatprep.subr.bf16.mxu0 0
      %759 = vmatpush1.bf16.msra.mxu0 0
      %760 = vmatprep.subr.bf16.mxu0 0
      %761 = vmatpush1.bf16.msra.mxu0 0
      %762 = vmatprep.subr.bf16.mxu0 0
      %763 = vmatpush1.bf16.msra.mxu0 0
      %764 = vmatprep.subr.bf16.mxu0 0
      %765 = vmatpush1.bf16.msra.mxu0 0
      %766 = vmatprep.subr.bf16.mxu0 0
      %767 = vmatpush1.bf16.msra.mxu0 0
      %768 = vmatprep.mubr.bf16.mxu0 0
      %769 = vmatmul.mubr.bf16.gmra.mrb[0].mxu0 %v424
      %v770 = vpop.f32.mrb[0].mxu0
      %v771 = vadd.f32 %v626, %v770
      %v772 = vpop.f32.mrb[0].mxu0
      %v773 = vpop.f32.mrb[0].mxu0
      %v774 = vadd.f32 %v629, %v773
      %v775 = vpop.f32.mrb[0].mxu0
      %776 = vmatprep.mubr.bf16.mxu0 0
      %777 = vmatmul.mubr.bf16.gmra.mrb[0].mxu0 %v425
      %v778 = vpop.f32.mrb[0].mxu0
      %v779 = vadd.f32 %v634, %v778
      %v780 = vpop.f32.mrb[0].mxu0
      %v781 = vpop.f32.mrb[0].mxu0
      %v782 = vadd.f32 %v637, %v781
      %v783 = vpop.f32.mrb[0].mxu0
      %784 = vmatprep.mubr.bf16.mxu0 0
      %785 = vmatmul.mubr.bf16.gmra.mrb[0].mxu0 %v426
      %v786 = vpop.f32.mrb[0].mxu0
      %v787 = vadd.f32 %v642, %v786
      %v788 = vpop.f32.mrb[0].mxu0
      %v789 = vpop.f32.mrb[0].mxu0
      %v790 = vadd.f32 %v645, %v789
      %v791 = vpop.f32.mrb[0].mxu0
      %792 = vmatprep.mubr.bf16.mxu0 0
      %793 = vmatmul.mubr.bf16.gmra.mrb[0].mxu0 %v427
      %v794 = vpop.f32.mrb[0].mxu0
      %v795 = vadd.f32 %v650, %v794
      %v796 = vpop.f32.mrb[0].mxu0
      %v797 = vpop.f32.mrb[0].mxu0
      %v798 = vadd.f32 %v653, %v797
      %v799 = vpop.f32.mrb[0].mxu0
      %800 = vmatprep.mubr.bf16.mxu0 0
      %801 = vmatmul.mubr.bf16.gmra.mrb[0].mxu0 %v428
      %v802 = vpop.f32.mrb[0].mxu0
      %v803 = vadd.f32 %v658, %v802
      %v804 = vpop.f32.mrb[0].mxu0
      %v805 = vpop.f32.mrb[0].mxu0
      %v806 = vadd.f32 %v661, %v805
      %v807 = vpop.f32.mrb[0].mxu0
      %808 = vmatprep.mubr.bf16.mxu0 0
      %809 = vmatmul.mubr.bf16.gmra.mrb[0].mxu0 %v429
      %v810 = vpop.f32.mrb[0].mxu0
      %v811 = vadd.f32 %v666, %v810
      %v812 = vpop.f32.mrb[0].mxu0
      %v813 = vpop.f32.mrb[0].mxu0
      %v814 = vadd.f32 %v669, %v813
      %v815 = vpop.f32.mrb[0].mxu0
      %816 = vmatprep.mubr.bf16.mxu0 0
      %817 = vmatmul.mubr.bf16.gmra.mrb[0].mxu0 %v430
      %v818 = vpop.f32.mrb[0].mxu0
      %v819 = vadd.f32 %v674, %v818
      %v820 = vpop.f32.mrb[0].mxu0
      %v821 = vpop.f32.mrb[0].mxu0
      %v822 = vadd.f32 %v677, %v821
      %v823 = vpop.f32.mrb[0].mxu0
      %824 = vmatprep.mubr.bf16.mxu0 0
      %825 = vmatmul.mubr.bf16.gmra.mrb[0].mxu0 %v431
      %v826 = vpop.f32.mrb[0].mxu0
      %v827 = vadd.f32 %v682, %v826
      %v828 = vpop.f32.mrb[0].mxu0
      %v829 = vpop.f32.mrb[0].mxu0
      %v830 = vadd.f32 %v685, %v829
      %v831 = vpop.f32.mrb[0].mxu0
      %832 = vdwg.mxu0
      %v833 = vld [vmem:[#allocation2] sm:$0xfe]
      %s834 = scalar_lea.vmem %s2, 128
      %v835 = vld [vmem:[%s834] sm:$0xf]
      %v836 = vld [vmem:[%s834 + $0x4] sm:$0xf]
      %v837 = vld [vmem:[%s834 + $0x8] sm:$0xf]
      %v838 = vld [vmem:[%s834 + $0xc] sm:$0xf]
      %v839 = vld [vmem:[%s834 + $0x10] sm:$0xf]
      %v840 = vld [vmem:[%s834 + $0x14] sm:$0xf]
      %v841 = vld [vmem:[%s834 + $0x18] sm:$0xf]
      %v842 = vld [vmem:[%s834 + $0x1c] sm:$0xf]
      %v843 = vld [vmem:[%s834 + $0x20] sm:$0xf]
      %v844 = vld [vmem:[%s834 + $0x24] sm:$0xf]
      %v845 = vld [vmem:[%s834 + $0x28] sm:$0xf]
      %v846 = vld [vmem:[%s834 + $0x2c] sm:$0xf]
      %v847 = vld [vmem:[%s834 + $0x30] sm:$0xf]
      %v848 = vld [vmem:[%s834 + $0x34] sm:$0xf]
      %v849 = vld [vmem:[%s834 + $0x38] sm:$0xf]
      %v850 = vld [vmem:[%s834 + $0x3c] sm:$0xf]
      %vm860 = vcmask 1046528
      %v861 = vrot.slane %v833, 1
      %v862 = vrot.slane %v425, 1
      %v863 = vsel %vm860, %v861, %v862
      %v864 = vrot.slane %v426, 1
      %v865 = vsel %vm860, %v862, %v864
      %v866 = vrot.slane %v427, 1
      %v867 = vsel %vm860, %v864, %v866
      %v868 = vrot.slane %v428, 1
      %v869 = vsel %vm860, %v866, %v868
      %v870 = vrot.slane %v429, 1
      %v871 = vsel %vm860, %v868, %v870
      %v872 = vrot.slane %v430, 1
      %v873 = vsel %vm860, %v870, %v872
      %v874 = vrot.slane %v431, 1
      %v875 = vsel %vm860, %v872, %v874
      %v876 = vrot.slane %v448, 1
      %v877 = vsel %vm860, %v874, %v876
      %v902 = vunpack.c.l.b16 %v835
      %v903 = vunpack.c.l.b16 %v836
      %v904 = vunpack.c.l.b16 %v837
      %v905 = vunpack.c.l.b16 %v838
      %v906 = vunpack.c.l.b16 %v839
      %v907 = vunpack.c.l.b16 %v840
      %v908 = vunpack.c.l.b16 %v841
      %v909 = vunpack.c.l.b16 %v842
      %v910 = vunpack.c.l.b16 %v843
      %v911 = vunpack.c.l.b16 %v844
      %v912 = vunpack.c.l.b16 %v845
      %v913 = vunpack.c.l.b16 %v846
      %v914 = vunpack.c.l.b16 %v847
      %v915 = vunpack.c.l.b16 %v848
      %v916 = vunpack.c.l.b16 %v849
      %v917 = vunpack.c.l.b16 %v850
      %v918 = vpack.c.b16 %v903, %v902
      %v919 = vpack.c.b16 %v905, %v904
      %v920 = vpack.c.b16 %v907, %v906
      %v921 = vpack.c.b16 %v909, %v908
      %v922 = vpack.c.b16 %v911, %v910
      %v923 = vpack.c.b16 %v913, %v912
      %v924 = vpack.c.b16 %v915, %v914
      %v925 = vpack.c.b16 %v917, %v916
      %934 = vmatprep.subr.bf16.mxu0 0
      %935 = vmatpush1.bf16.msra.mxu0 %v918
      %936 = vmatprep.subr.bf16.mxu0 0
      %937 = vmatpush1.bf16.msra.mxu0 %v919
      %938 = vmatprep.subr.bf16.mxu0 0
      %939 = vmatpush1.bf16.msra.mxu0 %v920
      %940 = vmatprep.subr.bf16.mxu0 0
      %941 = vmatpush1.bf16.msra.mxu0 %v921
      %942 = vmatprep.subr.bf16.mxu0 0
      %943 = vmatpush1.bf16.msra.mxu0 %v922
      %944 = vmatprep.subr.bf16.mxu0 0
      %945 = vmatpush1.bf16.msra.mxu0 %v923
      %946 = vmatprep.subr.bf16.mxu0 0
      %947 = vmatpush1.bf16.msra.mxu0 %v924
      %948 = vmatprep.subr.bf16.mxu0 0
      %949 = vmatpush1.bf16.msra.mxu0 %v925
      %950 = vmatprep.subr.bf16.mxu0 0
      %951 = vmatpush1.bf16.msra.mxu0 0
      %952 = vmatprep.subr.bf16.mxu0 0
      %953 = vmatpush1.bf16.msra.mxu0 0
      %954 = vmatprep.subr.bf16.mxu0 0
      %955 = vmatpush1.bf16.msra.mxu0 0
      %956 = vmatprep.subr.bf16.mxu0 0
      %957 = vmatpush1.bf16.msra.mxu0 0
      %958 = vmatprep.subr.bf16.mxu0 0
      %959 = vmatpush1.bf16.msra.mxu0 0
      %960 = vmatprep.subr.bf16.mxu0 0
      %961 = vmatpush1.bf16.msra.mxu0 0
      %962 = vmatprep.subr.bf16.mxu0 0
      %963 = vmatpush1.bf16.msra.mxu0 0
      %964 = vmatprep.subr.bf16.mxu0 0
      %965 = vmatpush1.bf16.msra.mxu0 0
      %966 = vmatprep.mubr.bf16.mxu0 0
      %967 = vmatmul.mubr.bf16.gmra.mrb[0].mxu0 %v863
      %v968 = vpop.f32.mrb[0].mxu0
      %v969 = vadd.f32 0.0, %v968
      %v970 = vpop.f32.mrb[0].mxu0
      %v971 = vpop.f32.mrb[0].mxu0
      %v972 = vadd.f32 0.0, %v971
      %v973 = vpop.f32.mrb[0].mxu0
      %974 = vmatprep.mubr.bf16.mxu0 0
      %975 = vmatmul.mubr.bf16.gmra.mrb[0].mxu0 %v865
      %v976 = vpop.f32.mrb[0].mxu0
      %v977 = vadd.f32 0.0, %v976
      %v978 = vpop.f32.mrb[0].mxu0
      %v979 = vpop.f32.mrb[0].mxu0
      %v980 = vadd.f32 0.0, %v979
      %v981 = vpop.f32.mrb[0].mxu0
      %982 = vmatprep.mubr.bf16.mxu0 0
      %983 = vmatmul.mubr.bf16.gmra.mrb[0].mxu0 %v867
      %v984 = vpop.f32.mrb[0].mxu0
      %v985 = vadd.f32 0.0, %v984
      %v986 = vpop.f32.mrb[0].mxu0
      %v987 = vpop.f32.mrb[0].mxu0
      %v988 = vadd.f32 0.0, %v987
      %v989 = vpop.f32.mrb[0].mxu0
      %990 = vmatprep.mubr.bf16.mxu0 0
      %991 = vmatmul.mubr.bf16.gmra.mrb[0].mxu0 %v869
      %v992 = vpop.f32.mrb[0].mxu0
      %v993 = vadd.f32 0.0, %v992
      %v994 = vpop.f32.mrb[0].mxu0
      %v995 = vpop.f32.mrb[0].mxu0
      %v996 = vadd.f32 0.0, %v995
      %v997 = vpop.f32.mrb[0].mxu0
      %998 = vmatprep.mubr.bf16.mxu0 0
      %999 = vmatmul.mubr.bf16.gmra.mrb[0].mxu0 %v871
      %v1000 = vpop.f32.mrb[0].mxu0
      %v1001 = vadd.f32 0.0, %v1000
      %v1002 = vpop.f32.mrb[0].mxu0
      %v1003 = vpop.f32.mrb[0].mxu0
      %v1004 = vadd.f32 0.0, %v1003
      %v1005 = vpop.f32.mrb[0].mxu0
      %1006 = vmatprep.mubr.bf16.mxu0 0
      %1007 = vmatmul.mubr.bf16.gmra.mrb[0].mxu0 %v873
      %v1008 = vpop.f32.mrb[0].mxu0
      %v1009 = vadd.f32 0.0, %v1008
      %v1010 = vpop.f32.mrb[0].mxu0
      %v1011 = vpop.f32.mrb[0].mxu0
      %v1012 = vadd.f32 0.0, %v1011
      %v1013 = vpop.f32.mrb[0].mxu0
      %1014 = vmatprep.mubr.bf16.mxu0 0
      %1015 = vmatmul.mubr.bf16.gmra.mrb[0].mxu0 %v875
      %v1016 = vpop.f32.mrb[0].mxu0
      %v1017 = vadd.f32 0.0, %v1016
      %v1018 = vpop.f32.mrb[0].mxu0
      %v1019 = vpop.f32.mrb[0].mxu0
      %v1020 = vadd.f32 0.0, %v1019
      %v1021 = vpop.f32.mrb[0].mxu0
      %1022 = vmatprep.mubr.bf16.mxu0 0
      %1023 = vmatmul.mubr.bf16.gmra.mrb[0].mxu0 %v877
      %v1024 = vpop.f32.mrb[0].mxu0
      %v1025 = vadd.f32 0.0, %v1024
      %v1026 = vpop.f32.mrb[0].mxu0
      %v1027 = vpop.f32.mrb[0].mxu0
      %v1028 = vadd.f32 0.0, %v1027
      %v1029 = vpop.f32.mrb[0].mxu0
      %1030 = vdwg.mxu0
      %v1031 = vadd.f32 %v771, %v969
      %v1032 = vadd.f32 %v774, %v972
      %v1033 = vadd.f32 %v779, %v977
      %v1034 = vadd.f32 %v782, %v980
      %v1035 = vadd.f32 %v787, %v985
      %v1036 = vadd.f32 %v790, %v988
      %v1037 = vadd.f32 %v795, %v993
      %v1038 = vadd.f32 %v798, %v996
      %v1039 = vadd.f32 %v803, %v1001
      %v1040 = vadd.f32 %v806, %v1004
      %v1041 = vadd.f32 %v811, %v1009
      %v1042 = vadd.f32 %v814, %v1012
      %v1043 = vadd.f32 %v819, %v1017
      %v1044 = vadd.f32 %v822, %v1020
      %v1045 = vadd.f32 %v827, %v1025
      %v1046 = vadd.f32 %v830, %v1028
      %v1047 = vld [vmem:[#allocation2] sm:$0xe0]
      %v1048 = vld [vmem:[#allocation2 + $0x40] sm:$0x1f]
      %s1049 = scalar_lea.vmem %s2, 192
      %v1050 = vld [vmem:[%s1049] sm:$0xf]
      %v1051 = vld [vmem:[%s1049 + $0x4] sm:$0xf]
      %v1052 = vld [vmem:[%s1049 + $0x8] sm:$0xf]
      %v1053 = vld [vmem:[%s1049 + $0xc] sm:$0xf]
      %v1054 = vld [vmem:[%s1049 + $0x10] sm:$0xf]
      %v1055 = vld [vmem:[%s1049 + $0x14] sm:$0xf]
      %v1056 = vld [vmem:[%s1049 + $0x18] sm:$0xf]
      %v1057 = vld [vmem:[%s1049 + $0x1c] sm:$0xf]
      %v1058 = vld [vmem:[%s1049 + $0x20] sm:$0xf]
      %v1059 = vld [vmem:[%s1049 + $0x24] sm:$0xf]
      %v1060 = vld [vmem:[%s1049 + $0x28] sm:$0xf]
      %v1061 = vld [vmem:[%s1049 + $0x2c] sm:$0xf]
      %v1062 = vld [vmem:[%s1049 + $0x30] sm:$0xf]
      %v1063 = vld [vmem:[%s1049 + $0x34] sm:$0xf]
      %v1064 = vld [vmem:[%s1049 + $0x38] sm:$0xf]
      %v1065 = vld [vmem:[%s1049 + $0x3c] sm:$0xf]
      %vm1068 = vcmask 1042432
      %v1069 = vrot.slane %v1047, 5
      %v1070 = vrot.slane %v425, 5
      %v1071 = vsel %vm1068, %v1069, %v1070
      %v1072 = vrot.slane %v426, 5
      %v1073 = vsel %vm1068, %v1070, %v1072
      %v1074 = vrot.slane %v427, 5
      %v1075 = vsel %vm1068, %v1072, %v1074
      %v1076 = vrot.slane %v428, 5
      %v1077 = vsel %vm1068, %v1074, %v1076
      %v1078 = vrot.slane %v429, 5
      %v1079 = vsel %vm1068, %v1076, %v1078
      %v1080 = vrot.slane %v430, 5
      %v1081 = vsel %vm1068, %v1078, %v1080
      %v1082 = vrot.slane %v431, 5
      %v1083 = vsel %vm1068, %v1080, %v1082
      %v1084 = vrot.slane %v1048, 5
      %v1085 = vsel %vm1068, %v1082, %v1084
      %v1110 = vunpack.c.l.b16 %v1050
      %v1111 = vunpack.c.l.b16 %v1051
      %v1112 = vunpack.c.l.b16 %v1052
      %v1113 = vunpack.c.l.b16 %v1053
      %v1114 = vunpack.c.l.b16 %v1054
      %v1115 = vunpack.c.l.b16 %v1055
      %v1116 = vunpack.c.l.b16 %v1056
      %v1117 = vunpack.c.l.b16 %v1057
      %v1118 = vunpack.c.l.b16 %v1058
      %v1119 = vunpack.c.l.b16 %v1059
      %v1120 = vunpack.c.l.b16 %v1060
      %v1121 = vunpack.c.l.b16 %v1061
      %v1122 = vunpack.c.l.b16 %v1062
      %v1123 = vunpack.c.l.b16 %v1063
      %v1124 = vunpack.c.l.b16 %v1064
      %v1125 = vunpack.c.l.b16 %v1065
      %v1126 = vpack.c.b16 %v1111, %v1110
      %v1127 = vpack.c.b16 %v1113, %v1112
      %v1128 = vpack.c.b16 %v1115, %v1114
      %v1129 = vpack.c.b16 %v1117, %v1116
      %v1130 = vpack.c.b16 %v1119, %v1118
      %v1131 = vpack.c.b16 %v1121, %v1120
      %v1132 = vpack.c.b16 %v1123, %v1122
      %v1133 = vpack.c.b16 %v1125, %v1124
      %1142 = vmatprep.subr.bf16.mxu0 0
      %1143 = vmatpush1.bf16.msra.mxu0 %v1126
      %1144 = vmatprep.subr.bf16.mxu0 0
      %1145 = vmatpush1.bf16.msra.mxu0 %v1127
      %1146 = vmatprep.subr.bf16.mxu0 0
      %1147 = vmatpush1.bf16.msra.mxu0 %v1128
      %1148 = vmatprep.subr.bf16.mxu0 0
      %1149 = vmatpush1.bf16.msra.mxu0 %v1129
      %1150 = vmatprep.subr.bf16.mxu0 0
      %1151 = vmatpush1.bf16.msra.mxu0 %v1130
      %1152 = vmatprep.subr.bf16.mxu0 0
      %1153 = vmatpush1.bf16.msra.mxu0 %v1131
      %1154 = vmatprep.subr.bf16.mxu0 0
      %1155 = vmatpush1.bf16.msra.mxu0 %v1132
      %1156 = vmatprep.subr.bf16.mxu0 0
      %1157 = vmatpush1.bf16.msra.mxu0 %v1133
      %1158 = vmatprep.subr.bf16.mxu0 0
      %1159 = vmatpush1.bf16.msra.mxu0 0
      %1160 = vmatprep.subr.bf16.mxu0 0
      %1161 = vmatpush1.bf16.msra.mxu0 0
      %1162 = vmatprep.subr.bf16.mxu0 0
      %1163 = vmatpush1.bf16.msra.mxu0 0
      %1164 = vmatprep.subr.bf16.mxu0 0
      %1165 = vmatpush1.bf16.msra.mxu0 0
      %1166 = vmatprep.subr.bf16.mxu0 0
      %1167 = vmatpush1.bf16.msra.mxu0 0
      %1168 = vmatprep.subr.bf16.mxu0 0
      %1169 = vmatpush1.bf16.msra.mxu0 0
      %1170 = vmatprep.subr.bf16.mxu0 0
      %1171 = vmatpush1.bf16.msra.mxu0 0
      %1172 = vmatprep.subr.bf16.mxu0 0
      %1173 = vmatpush1.bf16.msra.mxu0 0
      %1174 = vmatprep.mubr.bf16.mxu0 0
      %1175 = vmatmul.mubr.bf16.gmra.mrb[0].mxu0 %v1071
      %v1176 = vpop.f32.mrb[0].mxu0
      %v1177 = vadd.f32 0.0, %v1176
      %v1178 = vpop.f32.mrb[0].mxu0
      %v1179 = vpop.f32.mrb[0].mxu0
      %v1180 = vadd.f32 0.0, %v1179
      %v1181 = vpop.f32.mrb[0].mxu0
      %1182 = vmatprep.mubr.bf16.mxu0 0
      %1183 = vmatmul.mubr.bf16.gmra.mrb[0].mxu0 %v1073
      %v1184 = vpop.f32.mrb[0].mxu0
      %v1185 = vadd.f32 0.0, %v1184
      %v1186 = vpop.f32.mrb[0].mxu0
      %v1187 = vpop.f32.mrb[0].mxu0
      %v1188 = vadd.f32 0.0, %v1187
      %v1189 = vpop.f32.mrb[0].mxu0
      %1190 = vmatprep.mubr.bf16.mxu0 0
      %1191 = vmatmul.mubr.bf16.gmra.mrb[0].mxu0 %v1075
      %v1192 = vpop.f32.mrb[0].mxu0
      %v1193 = vadd.f32 0.0, %v1192
      %v1194 = vpop.f32.mrb[0].mxu0
      %v1195 = vpop.f32.mrb[0].mxu0
      %v1196 = vadd.f32 0.0, %v1195
      %v1197 = vpop.f32.mrb[0].mxu0
      %1198 = vmatprep.mubr.bf16.mxu0 0
      %1199 = vmatmul.mubr.bf16.gmra.mrb[0].mxu0 %v1077
      %v1200 = vpop.f32.mrb[0].mxu0
      %v1201 = vadd.f32 0.0, %v1200
      %v1202 = vpop.f32.mrb[0].mxu0
      %v1203 = vpop.f32.mrb[0].mxu0
      %v1204 = vadd.f32 0.0, %v1203
      %v1205 = vpop.f32.mrb[0].mxu0
      %1206 = vmatprep.mubr.bf16.mxu0 0
      %1207 = vmatmul.mubr.bf16.gmra.mrb[0].mxu0 %v1079
      %v1208 = vpop.f32.mrb[0].mxu0
      %v1209 = vadd.f32 0.0, %v1208
      %v1210 = vpop.f32.mrb[0].mxu0
      %v1211 = vpop.f32.mrb[0].mxu0
      %v1212 = vadd.f32 0.0, %v1211
      %v1213 = vpop.f32.mrb[0].mxu0
      %1214 = vmatprep.mubr.bf16.mxu0 0
      %1215 = vmatmul.mubr.bf16.gmra.mrb[0].mxu0 %v1081
      %v1216 = vpop.f32.mrb[0].mxu0
      %v1217 = vadd.f32 0.0, %v1216
      %v1218 = vpop.f32.mrb[0].mxu0
      %v1219 = vpop.f32.mrb[0].mxu0
      %v1220 = vadd.f32 0.0, %v1219
      %v1221 = vpop.f32.mrb[0].mxu0
      %1222 = vmatprep.mubr.bf16.mxu0 0
      %1223 = vmatmul.mubr.bf16.gmra.mrb[0].mxu0 %v1083
      %v1224 = vpop.f32.mrb[0].mxu0
      %v1225 = vadd.f32 0.0, %v1224
      %v1226 = vpop.f32.mrb[0].mxu0
      %v1227 = vpop.f32.mrb[0].mxu0
      %v1228 = vadd.f32 0.0, %v1227
      %v1229 = vpop.f32.mrb[0].mxu0
      %1230 = vmatprep.mubr.bf16.mxu0 0
      %1231 = vmatmul.mubr.bf16.gmra.mrb[0].mxu0 %v1085
      %v1232 = vpop.f32.mrb[0].mxu0
      %v1233 = vadd.f32 0.0, %v1232
      %v1234 = vpop.f32.mrb[0].mxu0
      %v1235 = vpop.f32.mrb[0].mxu0
      %v1236 = vadd.f32 0.0, %v1235
      %v1237 = vpop.f32.mrb[0].mxu0
      %1238 = vdwg.mxu0
      %v1239 = vadd.f32 %v1031, %v1177
      %v1240 = vadd.f32 %v1032, %v1180
      %v1241 = vadd.f32 %v1033, %v1185
      %v1242 = vadd.f32 %v1034, %v1188
      %v1243 = vadd.f32 %v1035, %v1193
      %v1244 = vadd.f32 %v1036, %v1196
      %v1245 = vadd.f32 %v1037, %v1201
      %v1246 = vadd.f32 %v1038, %v1204
      %v1247 = vadd.f32 %v1039, %v1209
      %v1248 = vadd.f32 %v1040, %v1212
      %v1249 = vadd.f32 %v1041, %v1217
      %v1250 = vadd.f32 %v1042, %v1220
      %v1251 = vadd.f32 %v1043, %v1225
      %v1252 = vadd.f32 %v1044, %v1228
      %v1253 = vadd.f32 %v1045, %v1233
      %v1254 = vadd.f32 %v1046, %v1236
      %v1255 = vld [vmem:[#allocation2 + $0x40] sm:$0x3f]
      %s1256 = scalar_lea.vmem %s2, 256
      %v1257 = vld [vmem:[%s1256] sm:$0xf]
      %v1258 = vld [vmem:[%s1256 + $0x4] sm:$0xf]
      %v1259 = vld [vmem:[%s1256 + $0x8] sm:$0xf]
      %v1260 = vld [vmem:[%s1256 + $0xc] sm:$0xf]
      %v1261 = vld [vmem:[%s1256 + $0x10] sm:$0xf]
      %v1262 = vld [vmem:[%s1256 + $0x14] sm:$0xf]
      %v1263 = vld [vmem:[%s1256 + $0x18] sm:$0xf]
      %v1264 = vld [vmem:[%s1256 + $0x1c] sm:$0xf]
      %v1265 = vld [vmem:[%s1256 + $0x20] sm:$0xf]
      %v1266 = vld [vmem:[%s1256 + $0x24] sm:$0xf]
      %v1267 = vld [vmem:[%s1256 + $0x28] sm:$0xf]
      %v1268 = vld [vmem:[%s1256 + $0x2c] sm:$0xf]
      %v1269 = vld [vmem:[%s1256 + $0x30] sm:$0xf]
      %v1270 = vld [vmem:[%s1256 + $0x34] sm:$0xf]
      %v1271 = vld [vmem:[%s1256 + $0x38] sm:$0xf]
      %v1272 = vld [vmem:[%s1256 + $0x3c] sm:$0xf]
      %vm1273 = vsmask.f32 2304
      %v1275 = vshrl.u32 %v1047, 16
      %v1277 = vrot.slane %v1275, 5
      %v1278 = vshll.u32 %v1047, 16
      %v1280 = vrot.slane %v1278, 6
      %v1281 = vor.u32 %v1277, %v1280
      %v1282 = vrot.slane %v479, 5
      %v1283 = vrot.slane %v475, 6
      %v1284 = vor.u32 %v1282, %v1283
      %v1285 = vsel %vm1273, %v1281, %v1284
      %v1286 = vrot.slane %v487, 5
      %v1287 = vrot.slane %v483, 6
      %v1288 = vor.u32 %v1286, %v1287
      %v1289 = vsel %vm1273, %v1284, %v1288
      %v1290 = vrot.slane %v495, 5
      %v1291 = vrot.slane %v491, 6
      %v1292 = vor.u32 %v1290, %v1291
      %v1293 = vsel %vm1273, %v1288, %v1292
      %v1294 = vrot.slane %v503, 5
      %v1295 = vrot.slane %v499, 6
      %v1296 = vor.u32 %v1294, %v1295
      %v1297 = vsel %vm1273, %v1292, %v1296
      %v1298 = vrot.slane %v511, 5
      %v1299 = vrot.slane %v507, 6
      %v1300 = vor.u32 %v1298, %v1299
      %v1301 = vsel %vm1273, %v1296, %v1300
      %v1302 = vrot.slane %v519, 5
      %v1303 = vrot.slane %v515, 6
      %v1304 = vor.u32 %v1302, %v1303
      %v1305 = vsel %vm1273, %v1300, %v1304
      %v1306 = vrot.slane %v527, 5
      %v1307 = vrot.slane %v523, 6
      %v1308 = vor.u32 %v1306, %v1307
      %v1309 = vsel %vm1273, %v1304, %v1308
      %v1311 = vshrl.u32 %v1255, 16
      %v1313 = vrot.slane %v1311, 5
      %v1314 = vshll.u32 %v1255, 16
      %v1316 = vrot.slane %v1314, 6
      %v1317 = vor.u32 %v1313, %v1316
      %v1318 = vsel %vm1273, %v1308, %v1317
      %v1343 = vunpack.c.l.b16 %v1257
      %v1344 = vunpack.c.l.b16 %v1258
      %v1345 = vunpack.c.l.b16 %v1259
      %v1346 = vunpack.c.l.b16 %v1260
      %v1347 = vunpack.c.l.b16 %v1261
      %v1348 = vunpack.c.l.b16 %v1262
      %v1349 = vunpack.c.l.b16 %v1263
      %v1350 = vunpack.c.l.b16 %v1264
      %v1351 = vunpack.c.l.b16 %v1265
      %v1352 = vunpack.c.l.b16 %v1266
      %v1353 = vunpack.c.l.b16 %v1267
      %v1354 = vunpack.c.l.b16 %v1268
      %v1355 = vunpack.c.l.b16 %v1269
      %v1356 = vunpack.c.l.b16 %v1270
      %v1357 = vunpack.c.l.b16 %v1271
      %v1358 = vunpack.c.l.b16 %v1272
      %v1359 = vpack.c.b16 %v1344, %v1343
      %v1360 = vpack.c.b16 %v1346, %v1345
      %v1361 = vpack.c.b16 %v1348, %v1347
      %v1362 = vpack.c.b16 %v1350, %v1349
      %v1363 = vpack.c.b16 %v1352, %v1351
      %v1364 = vpack.c.b16 %v1354, %v1353
      %v1365 = vpack.c.b16 %v1356, %v1355
      %v1366 = vpack.c.b16 %v1358, %v1357
      %1375 = vmatprep.subr.bf16.mxu0 0
      %1376 = vmatpush1.bf16.msra.mxu0 %v1359
      %1377 = vmatprep.subr.bf16.mxu0 0
      %1378 = vmatpush1.bf16.msra.mxu0 %v1360
      %1379 = vmatprep.subr.bf16.mxu0 0
      %1380 = vmatpush1.bf16.msra.mxu0 %v1361
      %1381 = vmatprep.subr.bf16.mxu0 0
      %1382 = vmatpush1.bf16.msra.mxu0 %v1362
      %1383 = vmatprep.subr.bf16.mxu0 0
      %1384 = vmatpush1.bf16.msra.mxu0 %v1363
      %1385 = vmatprep.subr.bf16.mxu0 0
      %1386 = vmatpush1.bf16.msra.mxu0 %v1364
      %1387 = vmatprep.subr.bf16.mxu0 0
      %1388 = vmatpush1.bf16.msra.mxu0 %v1365
      %1389 = vmatprep.subr.bf16.mxu0 0
      %1390 = vmatpush1.bf16.msra.mxu0 %v1366
      %1391 = vmatprep.subr.bf16.mxu0 0
      %1392 = vmatpush1.bf16.msra.mxu0 0
      %1393 = vmatprep.subr.bf16.mxu0 0
      %1394 = vmatpush1.bf16.msra.mxu0 0
      %1395 = vmatprep.subr.bf16.mxu0 0
      %1396 = vmatpush1.bf16.msra.mxu0 0
      %1397 = vmatprep.subr.bf16.mxu0 0
      %1398 = vmatpush1.bf16.msra.mxu0 0
      %1399 = vmatprep.subr.bf16.mxu0 0
      %1400 = vmatpush1.bf16.msra.mxu0 0
      %1401 = vmatprep.subr.bf16.mxu0 0
      %1402 = vmatpush1.bf16.msra.mxu0 0
      %1403 = vmatprep.subr.bf16.mxu0 0
      %1404 = vmatpush1.bf16.msra.mxu0 0
      %1405 = vmatprep.subr.bf16.mxu0 0
      %1406 = vmatpush1.bf16.msra.mxu0 0
      %1407 = vmatprep.mubr.bf16.mxu0 0
      %1408 = vmatmul.mubr.bf16.gmra.mrb[0].mxu0 %v1285
      %v1409 = vpop.f32.mrb[0].mxu0
      %v1410 = vadd.f32 0.0, %v1409
      %v1411 = vpop.f32.mrb[0].mxu0
      %v1412 = vpop.f32.mrb[0].mxu0
      %v1413 = vadd.f32 0.0, %v1412
      %v1414 = vpop.f32.mrb[0].mxu0
      %1415 = vmatprep.mubr.bf16.mxu0 0
      %1416 = vmatmul.mubr.bf16.gmra.mrb[0].mxu0 %v1289
      %v1417 = vpop.f32.mrb[0].mxu0
      %v1418 = vadd.f32 0.0, %v1417
      %v1419 = vpop.f32.mrb[0].mxu0
      %v1420 = vpop.f32.mrb[0].mxu0
      %v1421 = vadd.f32 0.0, %v1420
      %v1422 = vpop.f32.mrb[0].mxu0
      %1423 = vmatprep.mubr.bf16.mxu0 0
      %1424 = vmatmul.mubr.bf16.gmra.mrb[0].mxu0 %v1293
      %v1425 = vpop.f32.mrb[0].mxu0
      %v1426 = vadd.f32 0.0, %v1425
      %v1427 = vpop.f32.mrb[0].mxu0
      %v1428 = vpop.f32.mrb[0].mxu0
      %v1429 = vadd.f32 0.0, %v1428
      %v1430 = vpop.f32.mrb[0].mxu0
      %1431 = vmatprep.mubr.bf16.mxu0 0
      %1432 = vmatmul.mubr.bf16.gmra.mrb[0].mxu0 %v1297
      %v1433 = vpop.f32.mrb[0].mxu0
      %v1434 = vadd.f32 0.0, %v1433
      %v1435 = vpop.f32.mrb[0].mxu0
      %v1436 = vpop.f32.mrb[0].mxu0
      %v1437 = vadd.f32 0.0, %v1436
      %v1438 = vpop.f32.mrb[0].mxu0
      %1439 = vmatprep.mubr.bf16.mxu0 0
      %1440 = vmatmul.mubr.bf16.gmra.mrb[0].mxu0 %v1301
      %v1441 = vpop.f32.mrb[0].mxu0
      %v1442 = vadd.f32 0.0, %v1441
      %v1443 = vpop.f32.mrb[0].mxu0
      %v1444 = vpop.f32.mrb[0].mxu0
      %v1445 = vadd.f32 0.0, %v1444
      %v1446 = vpop.f32.mrb[0].mxu0
      %1447 = vmatprep.mubr.bf16.mxu0 0
      %1448 = vmatmul.mubr.bf16.gmra.mrb[0].mxu0 %v1305
      %v1449 = vpop.f32.mrb[0].mxu0
      %v1450 = vadd.f32 0.0, %v1449
      %v1451 = vpop.f32.mrb[0].mxu0
      %v1452 = vpop.f32.mrb[0].mxu0
      %v1453 = vadd.f32 0.0, %v1452
      %v1454 = vpop.f32.mrb[0].mxu0
      %1455 = vmatprep.mubr.bf16.mxu0 0
      %1456 = vmatmul.mubr.bf16.gmra.mrb[0].mxu0 %v1309
      %v1457 = vpop.f32.mrb[0].mxu0
      %v1458 = vadd.f32 0.0, %v1457
      %v1459 = vpop.f32.mrb[0].mxu0
      %v1460 = vpop.f32.mrb[0].mxu0
      %v1461 = vadd.f32 0.0, %v1460
      %v1462 = vpop.f32.mrb[0].mxu0
      %1463 = vmatprep.mubr.bf16.mxu0 0
      %1464 = vmatmul.mubr.bf16.gmra.mrb[0].mxu0 %v1318
      %v1465 = vpop.f32.mrb[0].mxu0
      %v1466 = vadd.f32 0.0, %v1465
      %v1467 = vpop.f32.mrb[0].mxu0
      %v1468 = vpop.f32.mrb[0].mxu0
      %v1469 = vadd.f32 0.0, %v1468
      %v1470 = vpop.f32.mrb[0].mxu0
      %1471 = vdwg.mxu0
      %v1472 = vadd.f32 %v1239, %v1410
      %v1473 = vadd.f32 %v1240, %v1413
      %v1474 = vadd.f32 %v1241, %v1418
      %v1475 = vadd.f32 %v1242, %v1421
      %v1476 = vadd.f32 %v1243, %v1426
      %v1477 = vadd.f32 %v1244, %v1429
      %v1478 = vadd.f32 %v1245, %v1434
      %v1479 = vadd.f32 %v1246, %v1437
      %v1480 = vadd.f32 %v1247, %v1442
      %v1481 = vadd.f32 %v1248, %v1445
      %v1482 = vadd.f32 %v1249, %v1450
      %v1483 = vadd.f32 %v1250, %v1453
      %v1484 = vadd.f32 %v1251, %v1458
      %v1485 = vadd.f32 %v1252, %v1461
      %v1486 = vadd.f32 %v1253, %v1466
      %v1487 = vadd.f32 %v1254, %v1469
      %v1488 = vld [vmem:[#allocation2] sm:$0xc0]
      %s1489 = scalar_lea.vmem %s2, 320
      %v1490 = vld [vmem:[%s1489] sm:$0xf]
      %v1491 = vld [vmem:[%s1489 + $0x4] sm:$0xf]
      %v1492 = vld [vmem:[%s1489 + $0x8] sm:$0xf]
      %v1493 = vld [vmem:[%s1489 + $0xc] sm:$0xf]
      %v1494 = vld [vmem:[%s1489 + $0x10] sm:$0xf]
      %v1495 = vld [vmem:[%s1489 + $0x14] sm:$0xf]
      %v1496 = vld [vmem:[%s1489 + $0x18] sm:$0xf]
      %v1497 = vld [vmem:[%s1489 + $0x1c] sm:$0xf]
      %v1498 = vld [vmem:[%s1489 + $0x20] sm:$0xf]
      %v1499 = vld [vmem:[%s1489 + $0x24] sm:$0xf]
      %v1500 = vld [vmem:[%s1489 + $0x28] sm:$0xf]
      %v1501 = vld [vmem:[%s1489 + $0x2c] sm:$0xf]
      %v1502 = vld [vmem:[%s1489 + $0x30] sm:$0xf]
      %v1503 = vld [vmem:[%s1489 + $0x34] sm:$0xf]
      %v1504 = vld [vmem:[%s1489 + $0x38] sm:$0xf]
      %v1505 = vld [vmem:[%s1489 + $0x3c] sm:$0xf]
      %vm1508 = vcmask 1041408
      %v1509 = vrot.slane %v1488, 6
      %v1510 = vrot.slane %v425, 6
      %v1511 = vsel %vm1508, %v1509, %v1510
      %v1512 = vrot.slane %v426, 6
      %v1513 = vsel %vm1508, %v1510, %v1512
      %v1514 = vrot.slane %v427, 6
      %v1515 = vsel %vm1508, %v1512, %v1514
      %v1516 = vrot.slane %v428, 6
      %v1517 = vsel %vm1508, %v1514, %v1516
      %v1518 = vrot.slane %v429, 6
      %v1519 = vsel %vm1508, %v1516, %v1518
      %v1520 = vrot.slane %v430, 6
      %v1521 = vsel %vm1508, %v1518, %v1520
      %v1522 = vrot.slane %v431, 6
      %v1523 = vsel %vm1508, %v1520, %v1522
      %v1524 = vrot.slane %v1255, 6
      %v1525 = vsel %vm1508, %v1522, %v1524
      %v1550 = vunpack.c.l.b16 %v1490
      %v1551 = vunpack.c.l.b16 %v1491
      %v1552 = vunpack.c.l.b16 %v1492
      %v1553 = vunpack.c.l.b16 %v1493
      %v1554 = vunpack.c.l.b16 %v1494
      %v1555 = vunpack.c.l.b16 %v1495
      %v1556 = vunpack.c.l.b16 %v1496
      %v1557 = vunpack.c.l.b16 %v1497
      %v1558 = vunpack.c.l.b16 %v1498
      %v1559 = vunpack.c.l.b16 %v1499
      %v1560 = vunpack.c.l.b16 %v1500
      %v1561 = vunpack.c.l.b16 %v1501
      %v1562 = vunpack.c.l.b16 %v1502
      %v1563 = vunpack.c.l.b16 %v1503
      %v1564 = vunpack.c.l.b16 %v1504
      %v1565 = vunpack.c.l.b16 %v1505
      %v1566 = vpack.c.b16 %v1551, %v1550
      %v1567 = vpack.c.b16 %v1553, %v1552
      %v1568 = vpack.c.b16 %v1555, %v1554
      %v1569 = vpack.c.b16 %v1557, %v1556
      %v1570 = vpack.c.b16 %v1559, %v1558
      %v1571 = vpack.c.b16 %v1561, %v1560
      %v1572 = vpack.c.b16 %v1563, %v1562
      %v1573 = vpack.c.b16 %v1565, %v1564
      %1582 = vmatprep.subr.bf16.mxu0 0
      %1583 = vmatpush1.bf16.msra.mxu0 %v1566
      %1584 = vmatprep.subr.bf16.mxu0 0
      %1585 = vmatpush1.bf16.msra.mxu0 %v1567
      %1586 = vmatprep.subr.bf16.mxu0 0
      %1587 = vmatpush1.bf16.msra.mxu0 %v1568
      %1588 = vmatprep.subr.bf16.mxu0 0
      %1589 = vmatpush1.bf16.msra.mxu0 %v1569
      %1590 = vmatprep.subr.bf16.mxu0 0
      %1591 = vmatpush1.bf16.msra.mxu0 %v1570
      %1592 = vmatprep.subr.bf16.mxu0 0
      %1593 = vmatpush1.bf16.msra.mxu0 %v1571
      %1594 = vmatprep.subr.bf16.mxu0 0
      %1595 = vmatpush1.bf16.msra.mxu0 %v1572
      %1596 = vmatprep.subr.bf16.mxu0 0
      %1597 = vmatpush1.bf16.msra.mxu0 %v1573
      %1598 = vmatprep.subr.bf16.mxu0 0
      %1599 = vmatpush1.bf16.msra.mxu0 0
      %1600 = vmatprep.subr.bf16.mxu0 0
      %1601 = vmatpush1.bf16.msra.mxu0 0
      %1602 = vmatprep.subr.bf16.mxu0 0
      %1603 = vmatpush1.bf16.msra.mxu0 0
      %1604 = vmatprep.subr.bf16.mxu0 0
      %1605 = vmatpush1.bf16.msra.mxu0 0
      %1606 = vmatprep.subr.bf16.mxu0 0
      %1607 = vmatpush1.bf16.msra.mxu0 0
      %1608 = vmatprep.subr.bf16.mxu0 0
      %1609 = vmatpush1.bf16.msra.mxu0 0
      %1610 = vmatprep.subr.bf16.mxu0 0
      %1611 = vmatpush1.bf16.msra.mxu0 0
      %1612 = vmatprep.subr.bf16.mxu0 0
      %1613 = vmatpush1.bf16.msra.mxu0 0
      %1614 = vmatprep.mubr.bf16.mxu0 0
      %1615 = vmatmul.mubr.bf16.gmra.mrb[0].mxu0 %v1511
      %v1616 = vpop.f32.mrb[0].mxu0
      %v1617 = vadd.f32 0.0, %v1616
      %v1618 = vpop.f32.mrb[0].mxu0
      %v1619 = vpop.f32.mrb[0].mxu0
      %v1620 = vadd.f32 0.0, %v1619
      %v1621 = vpop.f32.mrb[0].mxu0
      %1622 = vmatprep.mubr.bf16.mxu0 0
      %1623 = vmatmul.mubr.bf16.gmra.mrb[0].mxu0 %v1513
      %v1624 = vpop.f32.mrb[0].mxu0
      %v1625 = vadd.f32 0.0, %v1624
      %v1626 = vpop.f32.mrb[0].mxu0
      %v1627 = vpop.f32.mrb[0].mxu0
      %v1628 = vadd.f32 0.0, %v1627
      %v1629 = vpop.f32.mrb[0].mxu0
      %1630 = vmatprep.mubr.bf16.mxu0 0
      %1631 = vmatmul.mubr.bf16.gmra.mrb[0].mxu0 %v1515
      %v1632 = vpop.f32.mrb[0].mxu0
      %v1633 = vadd.f32 0.0, %v1632
      %v1634 = vpop.f32.mrb[0].mxu0
      %v1635 = vpop.f32.mrb[0].mxu0
      %v1636 = vadd.f32 0.0, %v1635
      %v1637 = vpop.f32.mrb[0].mxu0
      %1638 = vmatprep.mubr.bf16.mxu0 0
      %1639 = vmatmul.mubr.bf16.gmra.mrb[0].mxu0 %v1517
      %v1640 = vpop.f32.mrb[0].mxu0
      %v1641 = vadd.f32 0.0, %v1640
      %v1642 = vpop.f32.mrb[0].mxu0
      %v1643 = vpop.f32.mrb[0].mxu0
      %v1644 = vadd.f32 0.0, %v1643
      %v1645 = vpop.f32.mrb[0].mxu0
      %1646 = vmatprep.mubr.bf16.mxu0 0
      %1647 = vmatmul.mubr.bf16.gmra.mrb[0].mxu0 %v1519
      %v1648 = vpop.f32.mrb[0].mxu0
      %v1649 = vadd.f32 0.0, %v1648
      %v1650 = vpop.f32.mrb[0].mxu0
      %v1651 = vpop.f32.mrb[0].mxu0
      %v1652 = vadd.f32 0.0, %v1651
      %v1653 = vpop.f32.mrb[0].mxu0
      %1654 = vmatprep.mubr.bf16.mxu0 0
      %1655 = vmatmul.mubr.bf16.gmra.mrb[0].mxu0 %v1521
      %v1656 = vpop.f32.mrb[0].mxu0
      %v1657 = vadd.f32 0.0, %v1656
      %v1658 = vpop.f32.mrb[0].mxu0
      %v1659 = vpop.f32.mrb[0].mxu0
      %v1660 = vadd.f32 0.0, %v1659
      %v1661 = vpop.f32.mrb[0].mxu0
      %1662 = vmatprep.mubr.bf16.mxu0 0
      %1663 = vmatmul.mubr.bf16.gmra.mrb[0].mxu0 %v1523
      %v1664 = vpop.f32.mrb[0].mxu0
      %v1665 = vadd.f32 0.0, %v1664
      %v1666 = vpop.f32.mrb[0].mxu0
      %v1667 = vpop.f32.mrb[0].mxu0
      %v1668 = vadd.f32 0.0, %v1667
      %v1669 = vpop.f32.mrb[0].mxu0
      %1670 = vmatprep.mubr.bf16.mxu0 0
      %1671 = vmatmul.mubr.bf16.gmra.mrb[0].mxu0 %v1525
      %v1672 = vpop.f32.mrb[0].mxu0
      %v1673 = vadd.f32 0.0, %v1672
      %v1674 = vpop.f32.mrb[0].mxu0
      %v1675 = vpop.f32.mrb[0].mxu0
      %v1676 = vadd.f32 0.0, %v1675
      %v1677 = vpop.f32.mrb[0].mxu0
      %1678 = vdwg.mxu0
      %v1679 = vadd.f32 %v1472, %v1617
      %v1680 = vadd.f32 %v1473, %v1620
      %v1681 = vadd.f32 %v1474, %v1625
      %v1682 = vadd.f32 %v1475, %v1628
      %v1683 = vadd.f32 %v1476, %v1633
      %v1684 = vadd.f32 %v1477, %v1636
      %v1685 = vadd.f32 %v1478, %v1641
      %v1686 = vadd.f32 %v1479, %v1644
      %v1687 = vadd.f32 %v1480, %v1649
      %v1688 = vadd.f32 %v1481, %v1652
      %v1689 = vadd.f32 %v1482, %v1657
      %v1690 = vadd.f32 %v1483, %v1660
      %v1691 = vadd.f32 %v1484, %v1665
      %v1692 = vadd.f32 %v1485, %v1668
      %v1693 = vadd.f32 %v1486, %v1673
      %v1694 = vadd.f32 %v1487, %v1676
      %v1695 = vld [vmem:[#allocation2 + $0x8] sm:$0xfc]
      %v1696 = vld [vmem:[#allocation2 + $0x10] sm:$0xff]
      %v1697 = vld [vmem:[#allocation2 + $0x18] sm:$0xff]
      %v1698 = vld [vmem:[#allocation2 + $0x20] sm:$0xff]
      %v1699 = vld [vmem:[#allocation2 + $0x28] sm:$0xff]
      %v1700 = vld [vmem:[#allocation2 + $0x30] sm:$0xff]
      %v1701 = vld [vmem:[#allocation2 + $0x38] sm:$0xff]
      %v1702 = vld [vmem:[#allocation2 + $0x40] sm:$0xff]
      %v1703 = vld [vmem:[#allocation2 + $0x48] sm:$0x3]
      %s1704 = scalar_lea.vmem %s2, 384
      %v1705 = vld [vmem:[%s1704] sm:$0xf]
      %v1706 = vld [vmem:[%s1704 + $0x4] sm:$0xf]
      %v1707 = vld [vmem:[%s1704 + $0x8] sm:$0xf]
      %v1708 = vld [vmem:[%s1704 + $0xc] sm:$0xf]
      %v1709 = vld [vmem:[%s1704 + $0x10] sm:$0xf]
      %v1710 = vld [vmem:[%s1704 + $0x14] sm:$0xf]
      %v1711 = vld [vmem:[%s1704 + $0x18] sm:$0xf]
      %v1712 = vld [vmem:[%s1704 + $0x1c] sm:$0xf]
      %v1713 = vld [vmem:[%s1704 + $0x20] sm:$0xf]
      %v1714 = vld [vmem:[%s1704 + $0x24] sm:$0xf]
      %v1715 = vld [vmem:[%s1704 + $0x28] sm:$0xf]
      %v1716 = vld [vmem:[%s1704 + $0x2c] sm:$0xf]
      %v1717 = vld [vmem:[%s1704 + $0x30] sm:$0xf]
      %v1718 = vld [vmem:[%s1704 + $0x34] sm:$0xf]
      %v1719 = vld [vmem:[%s1704 + $0x38] sm:$0xf]
      %v1720 = vld [vmem:[%s1704 + $0x3c] sm:$0xf]
      %vm1730 = vcmask 1045504
      %v1731 = vrot.slane %v1695, 2
      %v1732 = vrot.slane %v1696, 2
      %v1733 = vsel %vm1730, %v1731, %v1732
      %v1734 = vrot.slane %v1697, 2
      %v1735 = vsel %vm1730, %v1732, %v1734
      %v1736 = vrot.slane %v1698, 2
      %v1737 = vsel %vm1730, %v1734, %v1736
      %v1738 = vrot.slane %v1699, 2
      %v1739 = vsel %vm1730, %v1736, %v1738
      %v1740 = vrot.slane %v1700, 2
      %v1741 = vsel %vm1730, %v1738, %v1740
      %v1742 = vrot.slane %v1701, 2
      %v1743 = vsel %vm1730, %v1740, %v1742
      %v1744 = vrot.slane %v1702, 2
      %v1745 = vsel %vm1730, %v1742, %v1744
      %v1746 = vrot.slane %v1703, 2
      %v1747 = vsel %vm1730, %v1744, %v1746
      %v1772 = vunpack.c.l.b16 %v1705
      %v1773 = vunpack.c.l.b16 %v1706
      %v1774 = vunpack.c.l.b16 %v1707
      %v1775 = vunpack.c.l.b16 %v1708
      %v1776 = vunpack.c.l.b16 %v1709
      %v1777 = vunpack.c.l.b16 %v1710
      %v1778 = vunpack.c.l.b16 %v1711
      %v1779 = vunpack.c.l.b16 %v1712
      %v1780 = vunpack.c.l.b16 %v1713
      %v1781 = vunpack.c.l.b16 %v1714
      %v1782 = vunpack.c.l.b16 %v1715
      %v1783 = vunpack.c.l.b16 %v1716
      %v1784 = vunpack.c.l.b16 %v1717
      %v1785 = vunpack.c.l.b16 %v1718
      %v1786 = vunpack.c.l.b16 %v1719
      %v1787 = vunpack.c.l.b16 %v1720
      %v1788 = vpack.c.b16 %v1773, %v1772
      %v1789 = vpack.c.b16 %v1775, %v1774
      %v1790 = vpack.c.b16 %v1777, %v1776
      %v1791 = vpack.c.b16 %v1779, %v1778
      %v1792 = vpack.c.b16 %v1781, %v1780
      %v1793 = vpack.c.b16 %v1783, %v1782
      %v1794 = vpack.c.b16 %v1785, %v1784
      %v1795 = vpack.c.b16 %v1787, %v1786
      %1804 = vmatprep.subr.bf16.mxu0 0
      %1805 = vmatpush1.bf16.msra.mxu0 %v1788
      %1806 = vmatprep.subr.bf16.mxu0 0
      %1807 = vmatpush1.bf16.msra.mxu0 %v1789
      %1808 = vmatprep.subr.bf16.mxu0 0
      %1809 = vmatpush1.bf16.msra.mxu0 %v1790
      %1810 = vmatprep.subr.bf16.mxu0 0
      %1811 = vmatpush1.bf16.msra.mxu0 %v1791
      %1812 = vmatprep.subr.bf16.mxu0 0
      %1813 = vmatpush1.bf16.msra.mxu0 %v1792
      %1814 = vmatprep.subr.bf16.mxu0 0
      %1815 = vmatpush1.bf16.msra.mxu0 %v1793
      %1816 = vmatprep.subr.bf16.mxu0 0
      %1817 = vmatpush1.bf16.msra.mxu0 %v1794
      %1818 = vmatprep.subr.bf16.mxu0 0
      %1819 = vmatpush1.bf16.msra.mxu0 %v1795
      %1820 = vmatprep.subr.bf16.mxu0 0
      %1821 = vmatpush1.bf16.msra.mxu0 0
      %1822 = vmatprep.subr.bf16.mxu0 0
      %1823 = vmatpush1.bf16.msra.mxu0 0
      %1824 = vmatprep.subr.bf16.mxu0 0
      %1825 = vmatpush1.bf16.msra.mxu0 0
      %1826 = vmatprep.subr.bf16.mxu0 0
      %1827 = vmatpush1.bf16.msra.mxu0 0
      %1828 = vmatprep.subr.bf16.mxu0 0
      %1829 = vmatpush1.bf16.msra.mxu0 0
      %1830 = vmatprep.subr.bf16.mxu0 0
      %1831 = vmatpush1.bf16.msra.mxu0 0
      %1832 = vmatprep.subr.bf16.mxu0 0
      %1833 = vmatpush1.bf16.msra.mxu0 0
      %1834 = vmatprep.subr.bf16.mxu0 0
      %1835 = vmatpush1.bf16.msra.mxu0 0
      %1836 = vmatprep.mubr.bf16.mxu0 0
      %1837 = vmatmul.mubr.bf16.gmra.mrb[0].mxu0 %v1733
      %v1838 = vpop.f32.mrb[0].mxu0
      %v1839 = vadd.f32 0.0, %v1838
      %v1840 = vpop.f32.mrb[0].mxu0
      %v1841 = vpop.f32.mrb[0].mxu0
      %v1842 = vadd.f32 0.0, %v1841
      %v1843 = vpop.f32.mrb[0].mxu0
      %1844 = vmatprep.mubr.bf16.mxu0 0
      %1845 = vmatmul.mubr.bf16.gmra.mrb[0].mxu0 %v1735
      %v1846 = vpop.f32.mrb[0].mxu0
      %v1847 = vadd.f32 0.0, %v1846
      %v1848 = vpop.f32.mrb[0].mxu0
      %v1849 = vpop.f32.mrb[0].mxu0
      %v1850 = vadd.f32 0.0, %v1849
      %v1851 = vpop.f32.mrb[0].mxu0
      %1852 = vmatprep.mubr.bf16.mxu0 0
      %1853 = vmatmul.mubr.bf16.gmra.mrb[0].mxu0 %v1737
      %v1854 = vpop.f32.mrb[0].mxu0
      %v1855 = vadd.f32 0.0, %v1854
      %v1856 = vpop.f32.mrb[0].mxu0
      %v1857 = vpop.f32.mrb[0].mxu0
      %v1858 = vadd.f32 0.0, %v1857
      %v1859 = vpop.f32.mrb[0].mxu0
      %1860 = vmatprep.mubr.bf16.mxu0 0
      %1861 = vmatmul.mubr.bf16.gmra.mrb[0].mxu0 %v1739
      %v1862 = vpop.f32.mrb[0].mxu0
      %v1863 = vadd.f32 0.0, %v1862
      %v1864 = vpop.f32.mrb[0].mxu0
      %v1865 = vpop.f32.mrb[0].mxu0
      %v1866 = vadd.f32 0.0, %v1865
      %v1867 = vpop.f32.mrb[0].mxu0
      %1868 = vmatprep.mubr.bf16.mxu0 0
      %1869 = vmatmul.mubr.bf16.gmra.mrb[0].mxu0 %v1741
      %v1870 = vpop.f32.mrb[0].mxu0
      %v1871 = vadd.f32 0.0, %v1870
      %v1872 = vpop.f32.mrb[0].mxu0
      %v1873 = vpop.f32.mrb[0].mxu0
      %v1874 = vadd.f32 0.0, %v1873
      %v1875 = vpop.f32.mrb[0].mxu0
      %1876 = vmatprep.mubr.bf16.mxu0 0
      %1877 = vmatmul.mubr.bf16.gmra.mrb[0].mxu0 %v1743
      %v1878 = vpop.f32.mrb[0].mxu0
      %v1879 = vadd.f32 0.0, %v1878
      %v1880 = vpop.f32.mrb[0].mxu0
      %v1881 = vpop.f32.mrb[0].mxu0
      %v1882 = vadd.f32 0.0, %v1881
      %v1883 = vpop.f32.mrb[0].mxu0
      %1884 = vmatprep.mubr.bf16.mxu0 0
      %1885 = vmatmul.mubr.bf16.gmra.mrb[0].mxu0 %v1745
      %v1886 = vpop.f32.mrb[0].mxu0
      %v1887 = vadd.f32 0.0, %v1886
      %v1888 = vpop.f32.mrb[0].mxu0
      %v1889 = vpop.f32.mrb[0].mxu0
      %v1890 = vadd.f32 0.0, %v1889
      %v1891 = vpop.f32.mrb[0].mxu0
      %1892 = vmatprep.mubr.bf16.mxu0 0
      %1893 = vmatmul.mubr.bf16.gmra.mrb[0].mxu0 %v1747
      %v1894 = vpop.f32.mrb[0].mxu0
      %v1895 = vadd.f32 0.0, %v1894
      %v1896 = vpop.f32.mrb[0].mxu0
      %v1897 = vpop.f32.mrb[0].mxu0
      %v1898 = vadd.f32 0.0, %v1897
      %v1899 = vpop.f32.mrb[0].mxu0
      %1900 = vdwg.mxu0
      %v1901 = vadd.f32 %v1679, %v1839
      %v1902 = vadd.f32 %v1680, %v1842
      %v1903 = vadd.f32 %v1681, %v1847
      %v1904 = vadd.f32 %v1682, %v1850
      %v1905 = vadd.f32 %v1683, %v1855
      %v1906 = vadd.f32 %v1684, %v1858
      %v1907 = vadd.f32 %v1685, %v1863
      %v1908 = vadd.f32 %v1686, %v1866
      %v1909 = vadd.f32 %v1687, %v1871
      %v1910 = vadd.f32 %v1688, %v1874
      %v1911 = vadd.f32 %v1689, %v1879
      %v1912 = vadd.f32 %v1690, %v1882
      %v1913 = vadd.f32 %v1691, %v1887
      %v1914 = vadd.f32 %v1692, %v1890
      %v1915 = vadd.f32 %v1693, %v1895
      %v1916 = vadd.f32 %v1694, %v1898
      %v1917 = vld [vmem:[#allocation2 + $0x48] sm:$0x7]
      %s1918 = scalar_lea.vmem %s2, 448
      %v1919 = vld [vmem:[%s1918] sm:$0xf]
      %v1920 = vld [vmem:[%s1918 + $0x4] sm:$0xf]
      %v1921 = vld [vmem:[%s1918 + $0x8] sm:$0xf]
      %v1922 = vld [vmem:[%s1918 + $0xc] sm:$0xf]
      %v1923 = vld [vmem:[%s1918 + $0x10] sm:$0xf]
      %v1924 = vld [vmem:[%s1918 + $0x14] sm:$0xf]
      %v1925 = vld [vmem:[%s1918 + $0x18] sm:$0xf]
      %v1926 = vld [vmem:[%s1918 + $0x1c] sm:$0xf]
      %v1927 = vld [vmem:[%s1918 + $0x20] sm:$0xf]
      %v1928 = vld [vmem:[%s1918 + $0x24] sm:$0xf]
      %v1929 = vld [vmem:[%s1918 + $0x28] sm:$0xf]
      %v1930 = vld [vmem:[%s1918 + $0x2c] sm:$0xf]
      %v1931 = vld [vmem:[%s1918 + $0x30] sm:$0xf]
      %v1932 = vld [vmem:[%s1918 + $0x34] sm:$0xf]
      %v1933 = vld [vmem:[%s1918 + $0x38] sm:$0xf]
      %v1934 = vld [vmem:[%s1918 + $0x3c] sm:$0xf]
      %vm1935 = vsmask.f32 5376
      %v1937 = vshrl.u32 %v1695, 16
      %v1939 = vrot.slane %v1937, 2
      %v1940 = vshll.u32 %v1695, 16
      %v1942 = vrot.slane %v1940, 3
      %v1943 = vor.u32 %v1939, %v1942
      %v1945 = vshrl.u32 %v1696, 16
      %v1947 = vrot.slane %v1945, 2
      %v1948 = vshll.u32 %v1696, 16
      %v1950 = vrot.slane %v1948, 3
      %v1951 = vor.u32 %v1947, %v1950
      %v1952 = vsel %vm1935, %v1943, %v1951
      %v1954 = vshrl.u32 %v1697, 16
      %v1956 = vrot.slane %v1954, 2
      %v1957 = vshll.u32 %v1697, 16
      %v1959 = vrot.slane %v1957, 3
      %v1960 = vor.u32 %v1956, %v1959
      %v1961 = vsel %vm1935, %v1951, %v1960
      %v1963 = vshrl.u32 %v1698, 16
      %v1965 = vrot.slane %v1963, 2
      %v1966 = vshll.u32 %v1698, 16
      %v1968 = vrot.slane %v1966, 3
      %v1969 = vor.u32 %v1965, %v1968
      %v1970 = vsel %vm1935, %v1960, %v1969
      %v1972 = vshrl.u32 %v1699, 16
      %v1974 = vrot.slane %v1972, 2
      %v1975 = vshll.u32 %v1699, 16
      %v1977 = vrot.slane %v1975, 3
      %v1978 = vor.u32 %v1974, %v1977
      %v1979 = vsel %vm1935, %v1969, %v1978
      %v1981 = vshrl.u32 %v1700, 16
      %v1983 = vrot.slane %v1981, 2
      %v1984 = vshll.u32 %v1700, 16
      %v1986 = vrot.slane %v1984, 3
      %v1987 = vor.u32 %v1983, %v1986
      %v1988 = vsel %vm1935, %v1978, %v1987
      %v1990 = vshrl.u32 %v1701, 16
      %v1992 = vrot.slane %v1990, 2
      %v1993 = vshll.u32 %v1701, 16
      %v1995 = vrot.slane %v1993, 3
      %v1996 = vor.u32 %v1992, %v1995
      %v1997 = vsel %vm1935, %v1987, %v1996
      %v1999 = vshrl.u32 %v1702, 16
      %v2001 = vrot.slane %v1999, 2
      %v2002 = vshll.u32 %v1702, 16
      %v2004 = vrot.slane %v2002, 3
      %v2005 = vor.u32 %v2001, %v2004
      %v2006 = vsel %vm1935, %v1996, %v2005
      %v2008 = vshrl.u32 %v1917, 16
      %v2010 = vrot.slane %v2008, 2
      %v2011 = vshll.u32 %v1917, 16
      %v2013 = vrot.slane %v2011, 3
      %v2014 = vor.u32 %v2010, %v2013
      %v2015 = vsel %vm1935, %v2005, %v2014
      %v2040 = vunpack.c.l.b16 %v1919
      %v2041 = vunpack.c.l.b16 %v1920
      %v2042 = vunpack.c.l.b16 %v1921
      %v2043 = vunpack.c.l.b16 %v1922
      %v2044 = vunpack.c.l.b16 %v1923
      %v2045 = vunpack.c.l.b16 %v1924
      %v2046 = vunpack.c.l.b16 %v1925
      %v2047 = vunpack.c.l.b16 %v1926
      %v2048 = vunpack.c.l.b16 %v1927
      %v2049 = vunpack.c.l.b16 %v1928
      %v2050 = vunpack.c.l.b16 %v1929
      %v2051 = vunpack.c.l.b16 %v1930
      %v2052 = vunpack.c.l.b16 %v1931
      %v2053 = vunpack.c.l.b16 %v1932
      %v2054 = vunpack.c.l.b16 %v1933
      %v2055 = vunpack.c.l.b16 %v1934
      %v2056 = vpack.c.b16 %v2041, %v2040
      %v2057 = vpack.c.b16 %v2043, %v2042
      %v2058 = vpack.c.b16 %v2045, %v2044
      %v2059 = vpack.c.b16 %v2047, %v2046
      %v2060 = vpack.c.b16 %v2049, %v2048
      %v2061 = vpack.c.b16 %v2051, %v2050
      %v2062 = vpack.c.b16 %v2053, %v2052
      %v2063 = vpack.c.b16 %v2055, %v2054
      %2072 = vmatprep.subr.bf16.mxu0 0
      %2073 = vmatpush1.bf16.msra.mxu0 %v2056
      %2074 = vmatprep.subr.bf16.mxu0 0
      %2075 = vmatpush1.bf16.msra.mxu0 %v2057
      %2076 = vmatprep.subr.bf16.mxu0 0
      %2077 = vmatpush1.bf16.msra.mxu0 %v2058
      %2078 = vmatprep.subr.bf16.mxu0 0
      %2079 = vmatpush1.bf16.msra.mxu0 %v2059
      %2080 = vmatprep.subr.bf16.mxu0 0
      %2081 = vmatpush1.bf16.msra.mxu0 %v2060
      %2082 = vmatprep.subr.bf16.mxu0 0
      %2083 = vmatpush1.bf16.msra.mxu0 %v2061
      %2084 = vmatprep.subr.bf16.mxu0 0
      %2085 = vmatpush1.bf16.msra.mxu0 %v2062
      %2086 = vmatprep.subr.bf16.mxu0 0
      %2087 = vmatpush1.bf16.msra.mxu0 %v2063
      %2088 = vmatprep.subr.bf16.mxu0 0
      %2089 = vmatpush1.bf16.msra.mxu0 0
      %2090 = vmatprep.subr.bf16.mxu0 0
      %2091 = vmatpush1.bf16.msra.mxu0 0
      %2092 = vmatprep.subr.bf16.mxu0 0
      %2093 = vmatpush1.bf16.msra.mxu0 0
      %2094 = vmatprep.subr.bf16.mxu0 0
      %2095 = vmatpush1.bf16.msra.mxu0 0
      %2096 = vmatprep.subr.bf16.mxu0 0
      %2097 = vmatpush1.bf16.msra.mxu0 0
      %2098 = vmatprep.subr.bf16.mxu0 0
      %2099 = vmatpush1.bf16.msra.mxu0 0
      %2100 = vmatprep.subr.bf16.mxu0 0
      %2101 = vmatpush1.bf16.msra.mxu0 0
      %2102 = vmatprep.subr.bf16.mxu0 0
      %2103 = vmatpush1.bf16.msra.mxu0 0
      %2104 = vmatprep.mubr.bf16.mxu0 0
      %2105 = vmatmul.mubr.bf16.gmra.mrb[0].mxu0 %v1952
      %v2106 = vpop.f32.mrb[0].mxu0
      %v2107 = vadd.f32 0.0, %v2106
      %v2108 = vpop.f32.mrb[0].mxu0
      %v2109 = vpop.f32.mrb[0].mxu0
      %v2110 = vadd.f32 0.0, %v2109
      %v2111 = vpop.f32.mrb[0].mxu0
      %2112 = vmatprep.mubr.bf16.mxu0 0
      %2113 = vmatmul.mubr.bf16.gmra.mrb[0].mxu0 %v1961
      %v2114 = vpop.f32.mrb[0].mxu0
      %v2115 = vadd.f32 0.0, %v2114
      %v2116 = vpop.f32.mrb[0].mxu0
      %v2117 = vpop.f32.mrb[0].mxu0
      %v2118 = vadd.f32 0.0, %v2117
      %v2119 = vpop.f32.mrb[0].mxu0
      %2120 = vmatprep.mubr.bf16.mxu0 0
      %2121 = vmatmul.mubr.bf16.gmra.mrb[0].mxu0 %v1970
      %v2122 = vpop.f32.mrb[0].mxu0
      %v2123 = vadd.f32 0.0, %v2122
      %v2124 = vpop.f32.mrb[0].mxu0
      %v2125 = vpop.f32.mrb[0].mxu0
      %v2126 = vadd.f32 0.0, %v2125
      %v2127 = vpop.f32.mrb[0].mxu0
      %2128 = vmatprep.mubr.bf16.mxu0 0
      %2129 = vmatmul.mubr.bf16.gmra.mrb[0].mxu0 %v1979
      %v2130 = vpop.f32.mrb[0].mxu0
      %v2131 = vadd.f32 0.0, %v2130
      %v2132 = vpop.f32.mrb[0].mxu0
      %v2133 = vpop.f32.mrb[0].mxu0
      %v2134 = vadd.f32 0.0, %v2133
      %v2135 = vpop.f32.mrb[0].mxu0
      %2136 = vmatprep.mubr.bf16.mxu0 0
      %2137 = vmatmul.mubr.bf16.gmra.mrb[0].mxu0 %v1988
      %v2138 = vpop.f32.mrb[0].mxu0
      %v2139 = vadd.f32 0.0, %v2138
      %v2140 = vpop.f32.mrb[0].mxu0
      %v2141 = vpop.f32.mrb[0].mxu0
      %v2142 = vadd.f32 0.0, %v2141
      %v2143 = vpop.f32.mrb[0].mxu0
      %2144 = vmatprep.mubr.bf16.mxu0 0
      %2145 = vmatmul.mubr.bf16.gmra.mrb[0].mxu0 %v1997
      %v2146 = vpop.f32.mrb[0].mxu0
      %v2147 = vadd.f32 0.0, %v2146
      %v2148 = vpop.f32.mrb[0].mxu0
      %v2149 = vpop.f32.mrb[0].mxu0
      %v2150 = vadd.f32 0.0, %v2149
      %v2151 = vpop.f32.mrb[0].mxu0
      %2152 = vmatprep.mubr.bf16.mxu0 0
      %2153 = vmatmul.mubr.bf16.gmra.mrb[0].mxu0 %v2006
      %v2154 = vpop.f32.mrb[0].mxu0
      %v2155 = vadd.f32 0.0, %v2154
      %v2156 = vpop.f32.mrb[0].mxu0
      %v2157 = vpop.f32.mrb[0].mxu0
      %v2158 = vadd.f32 0.0, %v2157
      %v2159 = vpop.f32.mrb[0].mxu0
      %2160 = vmatprep.mubr.bf16.mxu0 0
      %2161 = vmatmul.mubr.bf16.gmra.mrb[0].mxu0 %v2015
      %v2162 = vpop.f32.mrb[0].mxu0
      %v2163 = vadd.f32 0.0, %v2162
      %v2164 = vpop.f32.mrb[0].mxu0
      %v2165 = vpop.f32.mrb[0].mxu0
      %v2166 = vadd.f32 0.0, %v2165
      %v2167 = vpop.f32.mrb[0].mxu0
      %2168 = vdwg.mxu0
      %v2169 = vadd.f32 %v1901, %v2107
      %v2170 = vadd.f32 %v1902, %v2110
      %v2171 = vadd.f32 %v1903, %v2115
      %v2172 = vadd.f32 %v1904, %v2118
      %v2173 = vadd.f32 %v1905, %v2123
      %v2174 = vadd.f32 %v1906, %v2126
      %v2175 = vadd.f32 %v1907, %v2131
      %v2176 = vadd.f32 %v1908, %v2134
      %v2177 = vadd.f32 %v1909, %v2139
      %v2178 = vadd.f32 %v1910, %v2142
      %v2179 = vadd.f32 %v1911, %v2147
      %v2180 = vadd.f32 %v1912, %v2150
      %v2181 = vadd.f32 %v1913, %v2155
      %v2182 = vadd.f32 %v1914, %v2158
      %v2183 = vadd.f32 %v1915, %v2163
      %v2184 = vadd.f32 %v1916, %v2166
      %v2185 = vld [vmem:[#allocation2 + $0x8] sm:$0xf8]
      %s2186 = scalar_lea.vmem %s2, 512
      %v2187 = vld [vmem:[%s2186] sm:$0xf]
      %v2188 = vld [vmem:[%s2186 + $0x4] sm:$0xf]
      %v2189 = vld [vmem:[%s2186 + $0x8] sm:$0xf]
      %v2190 = vld [vmem:[%s2186 + $0xc] sm:$0xf]
      %v2191 = vld [vmem:[%s2186 + $0x10] sm:$0xf]
      %v2192 = vld [vmem:[%s2186 + $0x14] sm:$0xf]
      %v2193 = vld [vmem:[%s2186 + $0x18] sm:$0xf]
      %v2194 = vld [vmem:[%s2186 + $0x1c] sm:$0xf]
      %v2195 = vld [vmem:[%s2186 + $0x20] sm:$0xf]
      %v2196 = vld [vmem:[%s2186 + $0x24] sm:$0xf]
      %v2197 = vld [vmem:[%s2186 + $0x28] sm:$0xf]
      %v2198 = vld [vmem:[%s2186 + $0x2c] sm:$0xf]
      %v2199 = vld [vmem:[%s2186 + $0x30] sm:$0xf]
      %v2200 = vld [vmem:[%s2186 + $0x34] sm:$0xf]
      %v2201 = vld [vmem:[%s2186 + $0x38] sm:$0xf]
      %v2202 = vld [vmem:[%s2186 + $0x3c] sm:$0xf]
      %vm2205 = vcmask 1044480
      %v2206 = vrot.slane %v2185, 3
      %v2207 = vrot.slane %v1696, 3
      %v2208 = vsel %vm2205, %v2206, %v2207
      %v2209 = vrot.slane %v1697, 3
      %v2210 = vsel %vm2205, %v2207, %v2209
      %v2211 = vrot.slane %v1698, 3
      %v2212 = vsel %vm2205, %v2209, %v2211
      %v2213 = vrot.slane %v1699, 3
      %v2214 = vsel %vm2205, %v2211, %v2213
      %v2215 = vrot.slane %v1700, 3
      %v2216 = vsel %vm2205, %v2213, %v2215
      %v2217 = vrot.slane %v1701, 3
      %v2218 = vsel %vm2205, %v2215, %v2217
      %v2219 = vrot.slane %v1702, 3
      %v2220 = vsel %vm2205, %v2217, %v2219
      %v2221 = vrot.slane %v1917, 3
      %v2222 = vsel %vm2205, %v2219, %v2221
      %v2247 = vunpack.c.l.b16 %v2187
      %v2248 = vunpack.c.l.b16 %v2188
      %v2249 = vunpack.c.l.b16 %v2189
      %v2250 = vunpack.c.l.b16 %v2190
      %v2251 = vunpack.c.l.b16 %v2191
      %v2252 = vunpack.c.l.b16 %v2192
      %v2253 = vunpack.c.l.b16 %v2193
      %v2254 = vunpack.c.l.b16 %v2194
      %v2255 = vunpack.c.l.b16 %v2195
      %v2256 = vunpack.c.l.b16 %v2196
      %v2257 = vunpack.c.l.b16 %v2197
      %v2258 = vunpack.c.l.b16 %v2198
      %v2259 = vunpack.c.l.b16 %v2199
      %v2260 = vunpack.c.l.b16 %v2200
      %v2261 = vunpack.c.l.b16 %v2201
      %v2262 = vunpack.c.l.b16 %v2202
      %v2263 = vpack.c.b16 %v2248, %v2247
      %v2264 = vpack.c.b16 %v2250, %v2249
      %v2265 = vpack.c.b16 %v2252, %v2251
      %v2266 = vpack.c.b16 %v2254, %v2253
      %v2267 = vpack.c.b16 %v2256, %v2255
      %v2268 = vpack.c.b16 %v2258, %v2257
      %v2269 = vpack.c.b16 %v2260, %v2259
      %v2270 = vpack.c.b16 %v2262, %v2261
      %2279 = vmatprep.subr.bf16.mxu0 0
      %2280 = vmatpush1.bf16.msra.mxu0 %v2263
      %2281 = vmatprep.subr.bf16.mxu0 0
      %2282 = vmatpush1.bf16.msra.mxu0 %v2264
      %2283 = vmatprep.subr.bf16.mxu0 0
      %2284 = vmatpush1.bf16.msra.mxu0 %v2265
      %2285 = vmatprep.subr.bf16.mxu0 0
      %2286 = vmatpush1.bf16.msra.mxu0 %v2266
      %2287 = vmatprep.subr.bf16.mxu0 0
      %2288 = vmatpush1.bf16.msra.mxu0 %v2267
      %2289 = vmatprep.subr.bf16.mxu0 0
      %2290 = vmatpush1.bf16.msra.mxu0 %v2268
      %2291 = vmatprep.subr.bf16.mxu0 0
      %2292 = vmatpush1.bf16.msra.mxu0 %v2269
      %2293 = vmatprep.subr.bf16.mxu0 0
      %2294 = vmatpush1.bf16.msra.mxu0 %v2270
      %2295 = vmatprep.subr.bf16.mxu0 0
      %2296 = vmatpush1.bf16.msra.mxu0 0
      %2297 = vmatprep.subr.bf16.mxu0 0
      %2298 = vmatpush1.bf16.msra.mxu0 0
      %2299 = vmatprep.subr.bf16.mxu0 0
      %2300 = vmatpush1.bf16.msra.mxu0 0
      %2301 = vmatprep.subr.bf16.mxu0 0
      %2302 = vmatpush1.bf16.msra.mxu0 0
      %2303 = vmatprep.subr.bf16.mxu0 0
      %2304 = vmatpush1.bf16.msra.mxu0 0
      %2305 = vmatprep.subr.bf16.mxu0 0
      %2306 = vmatpush1.bf16.msra.mxu0 0
      %2307 = vmatprep.subr.bf16.mxu0 0
      %2308 = vmatpush1.bf16.msra.mxu0 0
      %2309 = vmatprep.subr.bf16.mxu0 0
      %2310 = vmatpush1.bf16.msra.mxu0 0
      %2311 = vmatprep.mubr.bf16.mxu0 0
      %2312 = vmatmul.mubr.bf16.gmra.mrb[0].mxu0 %v2208
      %v2313 = vpop.f32.mrb[0].mxu0
      %v2314 = vadd.f32 0.0, %v2313
      %v2315 = vpop.f32.mrb[0].mxu0
      %v2316 = vpop.f32.mrb[0].mxu0
      %v2317 = vadd.f32 0.0, %v2316
      %v2318 = vpop.f32.mrb[0].mxu0
      %2319 = vmatprep.mubr.bf16.mxu0 0
      %2320 = vmatmul.mubr.bf16.gmra.mrb[0].mxu0 %v2210
      %v2321 = vpop.f32.mrb[0].mxu0
      %v2322 = vadd.f32 0.0, %v2321
      %v2323 = vpop.f32.mrb[0].mxu0
      %v2324 = vpop.f32.mrb[0].mxu0
      %v2325 = vadd.f32 0.0, %v2324
      %v2326 = vpop.f32.mrb[0].mxu0
      %2327 = vmatprep.mubr.bf16.mxu0 0
      %2328 = vmatmul.mubr.bf16.gmra.mrb[0].mxu0 %v2212
      %v2329 = vpop.f32.mrb[0].mxu0
      %v2330 = vadd.f32 0.0, %v2329
      %v2331 = vpop.f32.mrb[0].mxu0
      %v2332 = vpop.f32.mrb[0].mxu0
      %v2333 = vadd.f32 0.0, %v2332
      %v2334 = vpop.f32.mrb[0].mxu0
      %2335 = vmatprep.mubr.bf16.mxu0 0
      %2336 = vmatmul.mubr.bf16.gmra.mrb[0].mxu0 %v2214
      %v2337 = vpop.f32.mrb[0].mxu0
      %v2338 = vadd.f32 0.0, %v2337
      %v2339 = vpop.f32.mrb[0].mxu0
      %v2340 = vpop.f32.mrb[0].mxu0
      %v2341 = vadd.f32 0.0, %v2340
      %v2342 = vpop.f32.mrb[0].mxu0
      %2343 = vmatprep.mubr.bf16.mxu0 0
      %2344 = vmatmul.mubr.bf16.gmra.mrb[0].mxu0 %v2216
      %v2345 = vpop.f32.mrb[0].mxu0
      %v2346 = vadd.f32 0.0, %v2345
      %v2347 = vpop.f32.mrb[0].mxu0
      %v2348 = vpop.f32.mrb[0].mxu0
      %v2349 = vadd.f32 0.0, %v2348
      %v2350 = vpop.f32.mrb[0].mxu0
      %2351 = vmatprep.mubr.bf16.mxu0 0
      %2352 = vmatmul.mubr.bf16.gmra.mrb[0].mxu0 %v2218
      %v2353 = vpop.f32.mrb[0].mxu0
      %v2354 = vadd.f32 0.0, %v2353
      %v2355 = vpop.f32.mrb[0].mxu0
      %v2356 = vpop.f32.mrb[0].mxu0
      %v2357 = vadd.f32 0.0, %v2356
      %v2358 = vpop.f32.mrb[0].mxu0
      %2359 = vmatprep.mubr.bf16.mxu0 0
      %2360 = vmatmul.mubr.bf16.gmra.mrb[0].mxu0 %v2220
      %v2361 = vpop.f32.mrb[0].mxu0
      %v2362 = vadd.f32 0.0, %v2361
      %v2363 = vpop.f32.mrb[0].mxu0
      %v2364 = vpop.f32.mrb[0].mxu0
      %v2365 = vadd.f32 0.0, %v2364
      %v2366 = vpop.f32.mrb[0].mxu0
      %2367 = vmatprep.mubr.bf16.mxu0 0
      %2368 = vmatmul.mubr.bf16.gmra.mrb[0].mxu0 %v2222
      %v2369 = vpop.f32.mrb[0].mxu0
      %v2370 = vadd.f32 0.0, %v2369
      %v2371 = vpop.f32.mrb[0].mxu0
      %v2372 = vpop.f32.mrb[0].mxu0
      %v2373 = vadd.f32 0.0, %v2372
      %v2374 = vpop.f32.mrb[0].mxu0
      %2375 = vdwg.mxu0
      %v2376 = vadd.f32 %v2169, %v2314
      %v2377 = vadd.f32 %v2170, %v2317
      %v2378 = vadd.f32 %v2171, %v2322
      %v2379 = vadd.f32 %v2172, %v2325
      %v2380 = vadd.f32 %v2173, %v2330
      %v2381 = vadd.f32 %v2174, %v2333
      %v2382 = vadd.f32 %v2175, %v2338
      %v2383 = vadd.f32 %v2176, %v2341
      %v2384 = vadd.f32 %v2177, %v2346
      %v2385 = vadd.f32 %v2178, %v2349
      %v2386 = vadd.f32 %v2179, %v2354
      %v2387 = vadd.f32 %v2180, %v2357
      %v2388 = vadd.f32 %v2181, %v2362
      %v2389 = vadd.f32 %v2182, %v2365
      %v2390 = vadd.f32 %v2183, %v2370
      %v2391 = vadd.f32 %v2184, %v2373
      %v2392 = vld [vmem:[%s271] sm:$0xf]
      %v2393 = vld [vmem:[%s271 + $0x4] sm:$0xf]
      %v2394 = vld [vmem:[%s271 + $0x8] sm:$0xf]
      %v2395 = vld [vmem:[%s271 + $0xc] sm:$0xf]
      %v2396 = vld [vmem:[%s271 + $0x10] sm:$0xf]
      %v2397 = vld [vmem:[%s271 + $0x14] sm:$0xf]
      %v2398 = vld [vmem:[%s271 + $0x18] sm:$0xf]
      %v2399 = vld [vmem:[%s271 + $0x1c] sm:$0xf]
      %v2400 = vld [vmem:[%s271 + $0x20] sm:$0xf]
      %v2401 = vld [vmem:[%s271 + $0x24] sm:$0xf]
      %v2402 = vld [vmem:[%s271 + $0x28] sm:$0xf]
      %v2403 = vld [vmem:[%s271 + $0x2c] sm:$0xf]
      %v2404 = vld [vmem:[%s271 + $0x30] sm:$0xf]
      %v2405 = vld [vmem:[%s271 + $0x34] sm:$0xf]
      %v2406 = vld [vmem:[%s271 + $0x38] sm:$0xf]
      %v2407 = vld [vmem:[%s271 + $0x3c] sm:$0xf]
      %v2408 = vld [vmem:[%s4] sm:$0x3]
      %v2425 = vunpack.c.l.b16 %v2392
      %v2426 = vunpack.c.l.b16 %v2393
      %v2427 = vunpack.c.l.b16 %v2394
      %v2428 = vunpack.c.l.b16 %v2395
      %v2429 = vunpack.c.l.b16 %v2396
      %v2430 = vunpack.c.l.b16 %v2397
      %v2431 = vunpack.c.l.b16 %v2398
      %v2432 = vunpack.c.l.b16 %v2399
      %v2433 = vunpack.c.l.b16 %v2400
      %v2434 = vunpack.c.l.b16 %v2401
      %v2435 = vunpack.c.l.b16 %v2402
      %v2436 = vunpack.c.l.b16 %v2403
      %v2437 = vunpack.c.l.b16 %v2404
      %v2438 = vunpack.c.l.b16 %v2405
      %v2439 = vunpack.c.l.b16 %v2406
      %v2440 = vunpack.c.l.b16 %v2407
      %v2441 = vpack.c.b16 %v2426, %v2425
      %v2442 = vpack.c.b16 %v2428, %v2427
      %v2443 = vpack.c.b16 %v2430, %v2429
      %v2444 = vpack.c.b16 %v2432, %v2431
      %v2445 = vpack.c.b16 %v2434, %v2433
      %v2446 = vpack.c.b16 %v2436, %v2435
      %v2447 = vpack.c.b16 %v2438, %v2437
      %v2448 = vpack.c.b16 %v2440, %v2439
      %vm2449 = vcmask 31744
      %v2451 = vsel %vm2449, %v2441, 0
      %v2454 = vsel %vm2449, %v2442, 0
      %v2457 = vsel %vm2449, %v2443, 0
      %v2460 = vsel %vm2449, %v2444, 0
      %v2463 = vsel %vm2449, %v2445, 0
      %v2466 = vsel %vm2449, %v2446, 0
      %v2469 = vsel %vm2449, %v2447, 0
      %v2472 = vsel %vm2449, %v2448, 0
      %vm2474 = vcmask 1041408
      %v2476 = vsel %vm2474, %v2408, 0
      %2478 = vmatprep.subr.bf16.mxu0 0
      %2479 = vmatpush1.bf16.msra.mxu0 %v2476
      %2480 = vmatprep.subr.bf16.mxu0 0
      %2481 = vmatpush1.bf16.msra.mxu0 0
      %2482 = vmatprep.subr.bf16.mxu0 0
      %2483 = vmatpush1.bf16.msra.mxu0 0
      %2484 = vmatprep.subr.bf16.mxu0 0
      %2485 = vmatpush1.bf16.msra.mxu0 0
      %2486 = vmatprep.subr.bf16.mxu0 0
      %2487 = vmatpush1.bf16.msra.mxu0 0
      %2488 = vmatprep.subr.bf16.mxu0 0
      %2489 = vmatpush1.bf16.msra.mxu0 0
      %2490 = vmatprep.subr.bf16.mxu0 0
      %2491 = vmatpush1.bf16.msra.mxu0 0
      %2492 = vmatprep.subr.bf16.mxu0 0
      %2493 = vmatpush1.bf16.msra.mxu0 0
      %2494 = vmatprep.subr.bf16.mxu0 0
      %2495 = vmatpush1.bf16.msra.mxu0 0
      %2496 = vmatprep.subr.bf16.mxu0 0
      %2497 = vmatpush1.bf16.msra.mxu0 0
      %2498 = vmatprep.subr.bf16.mxu0 0
      %2499 = vmatpush1.bf16.msra.mxu0 0
      %2500 = vmatprep.subr.bf16.mxu0 0
      %2501 = vmatpush1.bf16.msra.mxu0 0
      %2502 = vmatprep.subr.bf16.mxu0 0
      %2503 = vmatpush1.bf16.msra.mxu0 0
      %2504 = vmatprep.subr.bf16.mxu0 0
      %2505 = vmatpush1.bf16.msra.mxu0 0
      %2506 = vmatprep.subr.bf16.mxu0 0
      %2507 = vmatpush1.bf16.msra.mxu0 0
      %2508 = vmatprep.subr.bf16.mxu0 0
      %2509 = vmatpush1.bf16.msra.mxu0 0
      %2510 = vmatprep.mubr.bf16.mxu0 0
      %2511 = vmatmul.mubr.bf16.gmra.mrb[0].mxu0 %v2451
      %v2512 = vpop.f32.mrb[0].mxu0
      %v2513 = vadd.f32 0.0, %v2512
      %v2514 = vpop.f32.mrb[0].mxu0
      %v2515 = vpop.f32.mrb[0].mxu0
      %v2516 = vadd.f32 0.0, %v2515
      %v2517 = vpop.f32.mrb[0].mxu0
      %2518 = vmatprep.mubr.bf16.mxu0 0
      %2519 = vmatmul.mubr.bf16.gmra.mrb[0].mxu0 %v2454
      %v2520 = vpop.f32.mrb[0].mxu0
      %v2521 = vadd.f32 0.0, %v2520
      %v2522 = vpop.f32.mrb[0].mxu0
      %v2523 = vpop.f32.mrb[0].mxu0
      %v2524 = vadd.f32 0.0, %v2523
      %v2525 = vpop.f32.mrb[0].mxu0
      %2526 = vmatprep.mubr.bf16.mxu0 0
      %2527 = vmatmul.mubr.bf16.gmra.mrb[0].mxu0 %v2457
      %v2528 = vpop.f32.mrb[0].mxu0
      %v2529 = vadd.f32 0.0, %v2528
      %v2530 = vpop.f32.mrb[0].mxu0
      %v2531 = vpop.f32.mrb[0].mxu0
      %v2532 = vadd.f32 0.0, %v2531
      %v2533 = vpop.f32.mrb[0].mxu0
      %2534 = vmatprep.mubr.bf16.mxu0 0
      %2535 = vmatmul.mubr.bf16.gmra.mrb[0].mxu0 %v2460
      %v2536 = vpop.f32.mrb[0].mxu0
      %v2537 = vadd.f32 0.0, %v2536
      %v2538 = vpop.f32.mrb[0].mxu0
      %v2539 = vpop.f32.mrb[0].mxu0
      %v2540 = vadd.f32 0.0, %v2539
      %v2541 = vpop.f32.mrb[0].mxu0
      %2542 = vmatprep.mubr.bf16.mxu0 0
      %2543 = vmatmul.mubr.bf16.gmra.mrb[0].mxu0 %v2463
      %v2544 = vpop.f32.mrb[0].mxu0
      %v2545 = vadd.f32 0.0, %v2544
      %v2546 = vpop.f32.mrb[0].mxu0
      %v2547 = vpop.f32.mrb[0].mxu0
      %v2548 = vadd.f32 0.0, %v2547
      %v2549 = vpop.f32.mrb[0].mxu0
      %2550 = vmatprep.mubr.bf16.mxu0 0
      %2551 = vmatmul.mubr.bf16.gmra.mrb[0].mxu0 %v2466
      %v2552 = vpop.f32.mrb[0].mxu0
      %v2553 = vadd.f32 0.0, %v2552
      %v2554 = vpop.f32.mrb[0].mxu0
      %v2555 = vpop.f32.mrb[0].mxu0
      %v2556 = vadd.f32 0.0, %v2555
      %v2557 = vpop.f32.mrb[0].mxu0
      %2558 = vmatprep.mubr.bf16.mxu0 0
      %2559 = vmatmul.mubr.bf16.gmra.mrb[0].mxu0 %v2469
      %v2560 = vpop.f32.mrb[0].mxu0
      %v2561 = vadd.f32 0.0, %v2560
      %v2562 = vpop.f32.mrb[0].mxu0
      %v2563 = vpop.f32.mrb[0].mxu0
      %v2564 = vadd.f32 0.0, %v2563
      %v2565 = vpop.f32.mrb[0].mxu0
      %2566 = vmatprep.mubr.bf16.mxu0 0
      %2567 = vmatmul.mubr.bf16.gmra.mrb[0].mxu0 %v2472
      %v2568 = vpop.f32.mrb[0].mxu0
      %v2569 = vadd.f32 0.0, %v2568
      %v2570 = vpop.f32.mrb[0].mxu0
      %v2571 = vpop.f32.mrb[0].mxu0
      %v2572 = vadd.f32 0.0, %v2571
      %v2573 = vpop.f32.mrb[0].mxu0
      %2574 = vdwg.mxu0
      %v2575 = vadd.f32 %v2376, %v2513
      %v2576 = vadd.f32 %v2377, %v2516
      %v2577 = vadd.f32 %v2378, %v2521
      %v2578 = vadd.f32 %v2379, %v2524
      %v2579 = vadd.f32 %v2380, %v2529
      %v2580 = vadd.f32 %v2381, %v2532
      %v2581 = vadd.f32 %v2382, %v2537
      %v2582 = vadd.f32 %v2383, %v2540
      %v2583 = vadd.f32 %v2384, %v2545
      %v2584 = vadd.f32 %v2385, %v2548
      %v2585 = vadd.f32 %v2386, %v2553
      %v2586 = vadd.f32 %v2387, %v2556
      %v2587 = vadd.f32 %v2388, %v2561
      %v2588 = vadd.f32 %v2389, %v2564
      %v2589 = vadd.f32 %v2390, %v2569
      %v2590 = vadd.f32 %v2391, %v2572
      %v2591 = vmax.f32 %v2575, 0.0
      %v2592 = vmax.f32 %v2576, 0.0
      %v2593 = vmax.f32 %v2577, 0.0
      %v2594 = vmax.f32 %v2578, 0.0
      %v2595 = vmax.f32 %v2579, 0.0
      %v2596 = vmax.f32 %v2580, 0.0
      %v2597 = vmax.f32 %v2581, 0.0
      %v2598 = vmax.f32 %v2582, 0.0
      %v2599 = vmax.f32 %v2583, 0.0
      %v2600 = vmax.f32 %v2584, 0.0
      %v2601 = vmax.f32 %v2585, 0.0
      %v2602 = vmax.f32 %v2586, 0.0
      %v2603 = vmax.f32 %v2587, 0.0
      %v2604 = vmax.f32 %v2588, 0.0
      %v2605 = vmax.f32 %v2589, 0.0
      %v2606 = vmax.f32 %v2590, 0.0
      %v2607 = vpack.c.bf16 %v2592, %v2591
      %v2608 = vpack.c.bf16 %v2594, %v2593
      %v2609 = vpack.c.bf16 %v2596, %v2595
      %v2610 = vpack.c.bf16 %v2598, %v2597
      %v2611 = vpack.c.bf16 %v2600, %v2599
      %v2612 = vpack.c.bf16 %v2602, %v2601
      %v2613 = vpack.c.bf16 %v2604, %v2603
      %v2614 = vpack.c.bf16 %v2606, %v2605
      %v2623 = vunpack.c.l.b16 %v2607
      %v2624 = vunpack.c.h.b16 %v2607
      %v2625 = vunpack.c.l.b16 %v2608
      %v2626 = vunpack.c.h.b16 %v2608
      %v2627 = vunpack.c.l.b16 %v2609
      %v2628 = vunpack.c.h.b16 %v2609
      %v2629 = vunpack.c.l.b16 %v2610
      %v2630 = vunpack.c.h.b16 %v2610
      %v2631 = vunpack.c.l.b16 %v2611
      %v2632 = vunpack.c.h.b16 %v2611
      %v2633 = vunpack.c.l.b16 %v2612
      %v2634 = vunpack.c.h.b16 %v2612
      %v2635 = vunpack.c.l.b16 %v2613
      %v2636 = vunpack.c.h.b16 %v2613
      %v2637 = vunpack.c.l.b16 %v2614
      %v2638 = vunpack.c.h.b16 %v2614
      %v2639 = vpack.c.b16 %v2623, %v2623
      %v2640 = vpack.c.b16 %v2624, %v2624
      %v2641 = vpack.c.b16 %v2625, %v2625
      %v2642 = vpack.c.b16 %v2626, %v2626
      %v2643 = vpack.c.b16 %v2627, %v2627
      %v2644 = vpack.c.b16 %v2628, %v2628
      %v2645 = vpack.c.b16 %v2629, %v2629
      %v2646 = vpack.c.b16 %v2630, %v2630
      %v2647 = vpack.c.b16 %v2631, %v2631
      %v2648 = vpack.c.b16 %v2632, %v2632
      %v2649 = vpack.c.b16 %v2633, %v2633
      %v2650 = vpack.c.b16 %v2634, %v2634
      %v2651 = vpack.c.b16 %v2635, %v2635
      %v2652 = vpack.c.b16 %v2636, %v2636
      %v2653 = vpack.c.b16 %v2637, %v2637
      %v2654 = vpack.c.b16 %v2638, %v2638
      %2671 = vst [vmem:[%s277] sm:$0xf] %v2639
      %2672 = vst [vmem:[%s277 + $0x4] sm:$0xf] %v2640
      %2673 = vst [vmem:[%s277 + $0x8] sm:$0xf] %v2641
      %2674 = vst [vmem:[%s277 + $0xc] sm:$0xf] %v2642
      %2675 = vst [vmem:[%s277 + $0x10] sm:$0xf] %v2643
      %2676 = vst [vmem:[%s277 + $0x14] sm:$0xf] %v2644
      %2677 = vst [vmem:[%s277 + $0x18] sm:$0xf] %v2645
      %2678 = vst [vmem:[%s277 + $0x1c] sm:$0xf] %v2646
      %2679 = vst [vmem:[%s277 + $0x20] sm:$0xf] %v2647
      %2680 = vst [vmem:[%s277 + $0x24] sm:$0xf] %v2648
      %2681 = vst [vmem:[%s277 + $0x28] sm:$0xf] %v2649
      %2682 = vst [vmem:[%s277 + $0x2c] sm:$0xf] %v2650
      %2683 = vst [vmem:[%s277 + $0x30] sm:$0xf] %v2651
      %2684 = vst [vmem:[%s277 + $0x34] sm:$0xf] %v2652
      %2685 = vst [vmem:[%s277 + $0x38] sm:$0xf] %v2653
      %2686 = vst [vmem:[%s277 + $0x3c] sm:$0xf] %v2654
      %s2687 = smul.u32 16, %s16
      %p2688 = scmp.lt.s32.totalorder %s2687, 31
      %s2689 = scalar_select %p2688, %s2687, 31
      %s2690 = smul.addr %s2689, 4
      %s2691 = scalar_lea.vmem %s5, %s2690
      // Predicated region
      $region41: #{a_call__.3} parent=39 // pred_check
        %p2692 = pneg %p156
      $region42: #{a_call__.3} parent=39 // pred_check_branch
        %2694 = sbr.rel (%p2692) target = $region44
      $region43: #{a_call__.3} parent=39 // pred_region
        %s2695 = smul.u32 16, %s16
      $region44: #{a_call__.3} parent=39 // pred_fallthru
        _
    $region40: #{a_call__.3} parent=5 // pred_fallthru
      _
    %p2696 = scmp.le.s32.totalorder 2, %s11
    // Predicated region
    $region45: #{a_call__.3} parent=5 // pred_check
      %p2697 = pneg %p2696
    $region46: #{a_call__.3} parent=5 // pred_check_branch
      %2699 = sbr.rel (%p2697) target = $region48
    $region47: #{a_call__.3} parent=5 // pred_region
      %s2700 = ssub.s32 %s11, 2
      // Predicated region
      $region49: #{a_call__.3} parent=47 // pred_check
        %p2701 = pneg %p162
      $region50: #{a_call__.3} parent=47 // pred_check_branch
        %2703 = sbr.rel (%p2701) target = $region52
      $region51: #{a_call__.3} parent=47 // pred_region
        %s2704 = smul.u32 16, %s17
        %p2705 = scmp.lt.s32.totalorder %s2704, 31
        %s2706 = scalar_select %p2705, %s2704, 31
        %s2707 = smul.addr %s2706, 4
        %s2708 = scalar_lea.vmem %s5, %s2707
      $region52: #{a_call__.3} parent=47 // pred_fallthru
        _
    $region48: #{a_call__.3} parent=5 // pred_fallthru
      _
  $region6: #{a_call__.3} parent=0 // loop_footer
    %s15 = sadd.s32 1, %s11
  $region7: #{a_call__.3} parent=0 // loop_footer_branch
    %10 = sbr.rel target = $region3
  $region8: #{a_call__.3} parent=0 // loop_exit
    _

</llo_original>
